<compile_context>
chip_gen: v7x
topology: tpu7x:2x2x1
jax: 0.10.0
libtpu: 0.0.40
codegen_flags: <defaults>
</compile_context>

<pallas_src>
import functools

import jax
import jax.numpy as jnp
from jax import lax
from jax.experimental import pallas as pl
from jax.experimental.pallas import tpu as pltpu

_LANE = 128  # TPU vreg lane width


def _round_up(n, m):
    return ((n + m - 1) // m) * m


def _tpu_info():
    try:
        return pltpu.get_tpu_info()
    except Exception:
        return None


def _vmem_capacity_bytes():
    info = _tpu_info()
    if info is not None:
        v = getattr(info, "vmem_capacity_bytes", None)
        if v:
            return int(v)
    return 128 * 1024 * 1024   # v5e/v6e physical; conservative default


def _tensorcores_per_chip():
    info = _tpu_info()
    if info is not None:
        for name in ("num_cores", "num_cores_per_chip", "core_count",
                     "num_tensorcores"):
            v = getattr(info, name, None)
            if isinstance(v, int) and v > 0:
                return v
    return 1   # v5e / v6e (and the safe fallback)


def mlp_kernel(x_ref, w1_ref, b1_ref, w2_ref, b2_ref, w3_ref, b3_ref,
               w4_ref, b4_ref, o_ref):
    # x arrives in its natural (TB, 4) layout; layer 1 contracts its last dim
    # (A @ B^T form), so the batch->lane relayout happens once, in VMEM, on
    # the otherwise idle XLU.  Everything downstream is feature-major
    # (features, TB): lane-dense activations and a full-width output store.
    x = x_ref[...].astype(jnp.float32)                              # (TB, 4)
    # layer 1: (32, 4) . (TB, 4)^T -> (32, TB), + bias, ReLU
    h = lax.dot_general(w1_ref[...], x, (((1,), (1,)), ((), ())),
                        preferred_element_type=jnp.float32)
    h = jnp.maximum(h + b1_ref[...], 0.0)
    # layer 2: (H, 32) @ (32, TB) -> (H, TB), + bias, ReLU
    h = jnp.dot(w2_ref[...], h, preferred_element_type=jnp.float32)
    h = jnp.maximum(h + b2_ref[...], 0.0)
    # layer 3: (H, H) @ (H, TB) -> (H, TB), + bias, ReLU
    h = jnp.dot(w3_ref[...], h, preferred_element_type=jnp.float32)
    h = jnp.maximum(h + b3_ref[...], 0.0)
    # layer 4: (1, H) @ (H, TB) -> (1, TB).  Kept on the MXU for bit-level
    # parity with the XLA reference dot (same default-precision lowering).
    y = jnp.dot(w4_ref[...], h, preferred_element_type=jnp.float32)
    o_ref[...] = (y + b4_ref[...]).astype(o_ref.dtype)


@functools.partial(jax.jit, static_argnames=("tile_b", "input_dtype"))
def deep_corrector_mlp(x, params, *, tile_b=8192, input_dtype=None):
    """x: [B, 4] float32.  params: dict of [in,out] weights / [1,out] biases.

    Returns [B, 1] float32 (identical to the PyTorch module's forward).
    """
    B, Fin = x.shape
    assert Fin == 4
    H = params["w2"].shape[1]

    if input_dtype is not None:           # opt-in bf16 input path (v6e/v7x)
        x = x.astype(input_dtype)

    # ---------------- tile / grid selection ----------------
    B_pad = _round_up(B, _LANE)
    tb = min(_round_up(max(tile_b, _LANE), _LANE), B_pad)

    # Per-sample VMEM: double-buffered x tile (lane-padded to 128), double-
    # buffered out tile, live f32 activation temps, plus slack.
    bytes_per_sample = (2 * 4 * _LANE            # x tile, 2 buffers
                        + 2 * 32                 # out tile, 2 buffers
                        + 4 * 4 * max(32, H)     # live activation temps
                        + 64)                    # transposed-x / misc slack
    vmem_cap = _vmem_capacity_bytes()
    budget = min(24 << 20, vmem_cap // 3)        # keep headroom on v7x (64 MiB)
    tb_cap = max(_LANE, (budget // bytes_per_sample) // _LANE * _LANE)
    tb = min(tb, tb_cap)

    # Only split a single full-batch tile when the chip actually has >1
    # TensorCore (v7x); on single-TC v5e/v6e extra steps are pure overhead.
    cores = _tensorcores_per_chip()
    if cores > 1:
        want_steps = 2 * cores
        tb_split = (B_pad // want_steps) // _LANE * _LANE
        if tb_split >= _LANE:
            tb = min(tb, tb_split)

    B_pad = _round_up(B_pad, tb)
    grid = (B_pad // tb,)

    weight_bytes = 4 * (32 * 4 + 32 + 32 * H + H + H * H + H + H + 1)
    vmem_needed = tb * bytes_per_sample + 2 * weight_bytes + (4 << 20)
    vmem_limit = int(min(max(32 << 20, vmem_needed),
                         max(vmem_cap - (8 << 20), 32 << 20)))

    # ------------- wrapper-side plumbing (all fused under jit) -------------
    if B_pad != B:                         # no-op when B is already aligned
        x = jnp.pad(x, ((0, B_pad - B), (0, 0)))

    w1t, b1t = params["w1"].T, params["b1"].T      # (32, 4), (32, 1)
    w2t, b2t = params["w2"].T, params["b2"].T      # (H, 32), (H, 1)
    w3t, b3t = params["w3"].T, params["b3"].T      # (H, H),  (H, 1)
    w4t, b4t = params["w4"].T, params["b4"].T      # (1, H),  (1, 1)

    def rep(shape):                        # VMEM-resident (constant) block
        return pl.BlockSpec(shape, lambda i: (0, 0))

    flops = 2 * B_pad * (4 * 32 + 32 * H + H * H + H)
    bytes_accessed = int(B_pad * 4 * x.dtype.itemsize + B_pad * 4
                         + weight_bytes)

    yT = pl.pallas_call(
        mlp_kernel,
        out_shape=jax.ShapeDtypeStruct((1, B_pad), jnp.float32),
        grid_spec=pl.GridSpec(
            grid=grid,
            in_specs=[
                pl.BlockSpec((tb, 4), lambda i: (i, 0)),   # x, natural layout
                rep((32, 4)), rep((32, 1)),                # layer 1
                rep((H, 32)), rep((H, 1)),                 # layer 2
                rep((H, H)),  rep((H, 1)),                 # layer 3
                rep((1, H)),  rep((1, 1)),                 # layer 4
            ],
            out_specs=pl.BlockSpec((1, tb), lambda i: (0, i)),
        ),
        compiler_params=pltpu.CompilerParams(
            dimension_semantics=("parallel",),
            vmem_limit_bytes=vmem_limit),
        cost_estimate=pl.CostEstimate(
            flops=flops, transcendentals=0, bytes_accessed=bytes_accessed),
    )(x, w1t, b1t, w2t, b2t, w3t, b3t, w4t, b4t)

    # (1, B) -> (B, 1): contiguous slice + reshape, free under jit.
    return yT[:, :B].reshape(B, 1)


def init_params(key, num_hidden_nodes):
    """Deterministic init matching nn.Linear shapes (U(-1/sqrt(fan_in), +))."""
    dims = [(4, 32), (32, num_hidden_nodes),
            (num_hidden_nodes, num_hidden_nodes), (num_hidden_nodes, 1)]
    params = {}
    for idx, (fan_in, fan_out) in enumerate(dims, start=1):
        key, kw, kb = jax.random.split(key, 3)
        bound = 1.0 / jnp.sqrt(jnp.float32(fan_in))
        params[f"w{idx}"] = jax.random.uniform(
            kw, (fan_in, fan_out), jnp.float32, -bound, bound)
        params[f"b{idx}"] = jax.random.uniform(
            kb, (1, fan_out), jnp.float32, -bound, bound)
    return params


def reference_forward(x, p):
    h = jnp.maximum(x @ p["w1"] + p["b1"], 0.0)
    h = jnp.maximum(h @ p["w2"] + p["b2"], 0.0)
    h = jnp.maximum(h @ p["w3"] + p["b3"], 0.0)
    return h @ p["w4"] + p["b4"]


if __name__ == "__main__":
    NUM_HIDDEN = 32          # num_hidden_nodes
    BATCH = 1024

    key = jax.random.PRNGKey(0)
    key, kx = jax.random.split(key)
    x = jax.random.normal(kx, (BATCH, 4), jnp.float32)
    params = init_params(key, NUM_HIDDEN)

    out = deep_corrector_mlp(x, params)
    out = jax.block_until_ready(out)

    ref = reference_forward(x, params)
    assert out.shape == (BATCH, 1)
    assert jnp.allclose(out, ref, atol=1e-5, rtol=1e-5), \
        float(jnp.max(jnp.abs(out - ref)))

    print("KERNEL_OK")
</pallas_src>

<mosaic_0001>
module attributes {stable_mosaic.version = 11 : i64} {
  func.func @mlp_kernel(%arg0: i32, %arg1: memref<1024x4xf32, #tpu.memory_space<vmem>>, %arg2: memref<32x4xf32, #tpu.memory_space<vmem>>, %arg3: memref<32x1xf32, #tpu.memory_space<vmem>>, %arg4: memref<32x32xf32, #tpu.memory_space<vmem>>, %arg5: memref<32x1xf32, #tpu.memory_space<vmem>>, %arg6: memref<32x32xf32, #tpu.memory_space<vmem>>, %arg7: memref<32x1xf32, #tpu.memory_space<vmem>>, %arg8: memref<1x32xf32, #tpu.memory_space<vmem>>, %arg9: memref<1x1xf32, #tpu.memory_space<vmem>>, %arg10: memref<1x1024xf32, #tpu.memory_space<vmem>>) attributes {dimension_semantics = [#tpu.dimension_semantics<parallel>], iteration_bounds = array<i64: 1>, scalar_prefetch = 0 : i64, scratch_operands = 0 : i64, tpu.core_type = #tpu.core_type<tc>, window_params = [{transform_indices = @transform_0, window_bounds = array<i64: 1024, 4>}, {pipeline_mode = #tpu.pipeline_mode<synchronous>, transform_indices = @transform_1, window_bounds = array<i64: 32, 4>}, {pipeline_mode = #tpu.pipeline_mode<synchronous>, transform_indices = @transform_2, window_bounds = array<i64: 32, 1>}, {pipeline_mode = #tpu.pipeline_mode<synchronous>, transform_indices = @transform_3, window_bounds = array<i64: 32, 32>}, {pipeline_mode = #tpu.pipeline_mode<synchronous>, transform_indices = @transform_4, window_bounds = array<i64: 32, 1>}, {pipeline_mode = #tpu.pipeline_mode<synchronous>, transform_indices = @transform_5, window_bounds = array<i64: 32, 32>}, {pipeline_mode = #tpu.pipeline_mode<synchronous>, transform_indices = @transform_6, window_bounds = array<i64: 32, 1>}, {pipeline_mode = #tpu.pipeline_mode<synchronous>, transform_indices = @transform_7, window_bounds = array<i64: 1, 32>}, {pipeline_mode = #tpu.pipeline_mode<synchronous>, transform_indices = @transform_8, window_bounds = array<i64: 1, 1>}, {transform_indices = @transform_9, window_bounds = array<i64: 1, 1024>}]} {
    %c0 = arith.constant 0 : index
    %c0_0 = arith.constant 0 : index
    %0 = vector.load %arg1[%c0, %c0_0] : memref<1024x4xf32, #tpu.memory_space<vmem>>, vector<1024x4xf32>
    %c0_1 = arith.constant 0 : index
    %c0_2 = arith.constant 0 : index
    %1 = vector.load %arg2[%c0_1, %c0_2] : memref<32x4xf32, #tpu.memory_space<vmem>>, vector<32x4xf32>
    %cst = arith.constant dense<0.000000e+00> : vector<32x1024xf32>
    %2 = tpu.matmul %1, %0, %cst {dimension_numbers = #tpu.dot_dimension_numbers<[1], [1], [0], [0], [0, 0, 1, 0], [], []>} : vector<32x4xf32>, vector<1024x4xf32>, vector<32x1024xf32> -> vector<32x1024xf32>
    %c0_3 = arith.constant 0 : index
    %c0_4 = arith.constant 0 : index
    %3 = vector.load %arg3[%c0_3, %c0_4] : memref<32x1xf32, #tpu.memory_space<vmem>>, vector<32x1xf32>
    %4 = vector.broadcast %3 : vector<32x1xf32> to vector<32x1024xf32>
    %5 = arith.addf %2, %4 : vector<32x1024xf32>
    %cst_5 = arith.constant 0.000000e+00 : f32
    %6 = vector.broadcast %cst_5 : f32 to vector<32x1024xf32>
    %7 = arith.maximumf %5, %6 : vector<32x1024xf32>
    %c0_6 = arith.constant 0 : index
    %c0_7 = arith.constant 0 : index
    %8 = vector.load %arg4[%c0_6, %c0_7] : memref<32x32xf32, #tpu.memory_space<vmem>>, vector<32x32xf32>
    %cst_8 = arith.constant dense<0.000000e+00> : vector<32x1024xf32>
    %9 = tpu.matmul %8, %7, %cst_8 {dimension_numbers = #tpu.dot_dimension_numbers<[1], [0], [0], [1], [0, 0, 1, 1], [], []>} : vector<32x32xf32>, vector<32x1024xf32>, vector<32x1024xf32> -> vector<32x1024xf32>
    %c0_9 = arith.constant 0 : index
    %c0_10 = arith.constant 0 : index
    %10 = vector.load %arg5[%c0_9, %c0_10] : memref<32x1xf32, #tpu.memory_space<vmem>>, vector<32x1xf32>
    %11 = vector.broadcast %10 : vector<32x1xf32> to vector<32x1024xf32>
    %12 = arith.addf %9, %11 : vector<32x1024xf32>
    %cst_11 = arith.constant 0.000000e+00 : f32
    %13 = vector.broadcast %cst_11 : f32 to vector<32x1024xf32>
    %14 = arith.maximumf %12, %13 : vector<32x1024xf32>
    %c0_12 = arith.constant 0 : index
    %c0_13 = arith.constant 0 : index
    %15 = vector.load %arg6[%c0_12, %c0_13] : memref<32x32xf32, #tpu.memory_space<vmem>>, vector<32x32xf32>
    %cst_14 = arith.constant dense<0.000000e+00> : vector<32x1024xf32>
    %16 = tpu.matmul %15, %14, %cst_14 {dimension_numbers = #tpu.dot_dimension_numbers<[1], [0], [0], [1], [0, 0, 1, 1], [], []>} : vector<32x32xf32>, vector<32x1024xf32>, vector<32x1024xf32> -> vector<32x1024xf32>
    %c0_15 = arith.constant 0 : index
    %c0_16 = arith.constant 0 : index
    %17 = vector.load %arg7[%c0_15, %c0_16] : memref<32x1xf32, #tpu.memory_space<vmem>>, vector<32x1xf32>
    %18 = vector.broadcast %17 : vector<32x1xf32> to vector<32x1024xf32>
    %19 = arith.addf %16, %18 : vector<32x1024xf32>
    %cst_17 = arith.constant 0.000000e+00 : f32
    %20 = vector.broadcast %cst_17 : f32 to vector<32x1024xf32>
    %21 = arith.maximumf %19, %20 : vector<32x1024xf32>
    %c0_18 = arith.constant 0 : index
    %c0_19 = arith.constant 0 : index
    %22 = vector.load %arg8[%c0_18, %c0_19] : memref<1x32xf32, #tpu.memory_space<vmem>>, vector<1x32xf32>
    %cst_20 = arith.constant dense<0.000000e+00> : vector<1x1024xf32>
    %23 = tpu.matmul %22, %21, %cst_20 {dimension_numbers = #tpu.dot_dimension_numbers<[1], [0], [0], [1], [0, 0, 1, 1], [], []>} : vector<1x32xf32>, vector<32x1024xf32>, vector<1x1024xf32> -> vector<1x1024xf32>
    %c0_21 = arith.constant 0 : index
    %c0_22 = arith.constant 0 : index
    %24 = vector.load %arg9[%c0_21, %c0_22] : memref<1x1xf32, #tpu.memory_space<vmem>>, vector<1x1xf32>
    %25 = vector.broadcast %24 : vector<1x1xf32> to vector<1x1024xf32>
    %26 = arith.addf %23, %25 : vector<1x1024xf32>
    %c0_23 = arith.constant 0 : index
    %c0_24 = arith.constant 0 : index
    %27 = vector.load %arg10[%c0_23, %c0_24] : memref<1x1024xf32, #tpu.memory_space<vmem>>, vector<1x1024xf32>
    tpu.vector_store %arg10[%c0_23, %c0_24], %26 {strides = array<i32>} : memref<1x1024xf32, #tpu.memory_space<vmem>>, vector<1x1024xf32>,
    return
  }
  func.func @transform_0(%arg0: i32) -> (i32, i32) {
    %c0_i32 = arith.constant 0 : i32
    %c0_i32_0 = arith.constant 0 : i32
    return %arg0, %c0_i32 : i32, i32
  }
  func.func @transform_1(%arg0: i32) -> (i32, i32) {
    %c0_i32 = arith.constant 0 : i32
    %c0_i32_0 = arith.constant 0 : i32
    %c0_i32_1 = arith.constant 0 : i32
    return %c0_i32, %c0_i32_0 : i32, i32
  }
  func.func @transform_2(%arg0: i32) -> (i32, i32) {
    %c0_i32 = arith.constant 0 : i32
    %c0_i32_0 = arith.constant 0 : i32
    %c0_i32_1 = arith.constant 0 : i32
    return %c0_i32, %c0_i32_0 : i32, i32
  }
  func.func @transform_3(%arg0: i32) -> (i32, i32) {
    %c0_i32 = arith.constant 0 : i32
    %c0_i32_0 = arith.constant 0 : i32
    %c0_i32_1 = arith.constant 0 : i32
    return %c0_i32, %c0_i32_0 : i32, i32
  }
  func.func @transform_4(%arg0: i32) -> (i32, i32) {
    %c0_i32 = arith.constant 0 : i32
    %c0_i32_0 = arith.constant 0 : i32
    %c0_i32_1 = arith.constant 0 : i32
    return %c0_i32, %c0_i32_0 : i32, i32
  }
  func.func @transform_5(%arg0: i32) -> (i32, i32) {
    %c0_i32 = arith.constant 0 : i32
    %c0_i32_0 = arith.constant 0 : i32
    %c0_i32_1 = arith.constant 0 : i32
    return %c0_i32, %c0_i32_0 : i32, i32
  }
  func.func @transform_6(%arg0: i32) -> (i32, i32) {
    %c0_i32 = arith.constant 0 : i32
    %c0_i32_0 = arith.constant 0 : i32
    %c0_i32_1 = arith.constant 0 : i32
    return %c0_i32, %c0_i32_0 : i32, i32
  }
  func.func @transform_7(%arg0: i32) -> (i32, i32) {
    %c0_i32 = arith.constant 0 : i32
    %c0_i32_0 = arith.constant 0 : i32
    %c0_i32_1 = arith.constant 0 : i32
    return %c0_i32, %c0_i32_0 : i32, i32
  }
  func.func @transform_8(%arg0: i32) -> (i32, i32) {
    %c0_i32 = arith.constant 0 : i32
    %c0_i32_0 = arith.constant 0 : i32
    %c0_i32_1 = arith.constant 0 : i32
    return %c0_i32, %c0_i32_0 : i32, i32
  }
  func.func @transform_9(%arg0: i32) -> (i32, i32) {
    %c0_i32 = arith.constant 0 : i32
    %c0_i32_0 = arith.constant 0 : i32
    return %c0_i32, %arg0 : i32, i32
  }
}

</mosaic_0001>

<llo_original>
// kernel: deep_corrector_mlp.1
$region0: #{deep_corrector_mlp.1}
  #allocation0 [shape = 'u32[]', space=smem, size = 0x4, offset = 0x4, fixed_abs, tag = 'smem constant byte address 0x4 - core index']
  #allocation1 [shape = 'u32[144,128]{1,0:T(1,128)}', space=vmem, size = 0x12000, scoped, tag = 'internal scratch']
  #allocation2 [shape = 'f32[1,1]{1,0:T(1,128)S(1)}', space=vmem, size = 0x200, scoped, tag = 'scoped memory for deep_corrector_mlp.1']
  %s0 = inlined_call_operand.vmem [shape: f32[1024,4], index: 0, kind: input, shape index: {}]
  %s1 = inlined_call_operand.vmem [shape: f32[32,4], index: 1, kind: input, shape index: {}]
  %s2 = inlined_call_operand.vmem [shape: f32[32,1], index: 2, kind: input, shape index: {}]
  %s3 = inlined_call_operand.vmem [shape: f32[32,32], index: 3, kind: input, shape index: {}]
  %s4 = inlined_call_operand.vmem [shape: f32[32,1], index: 4, kind: input, shape index: {}]
  %s5 = inlined_call_operand.vmem [shape: f32[32,32], index: 5, kind: input, shape index: {}]
  %s6 = inlined_call_operand.vmem [shape: f32[32,1], index: 6, kind: input, shape index: {}]
  %s7 = inlined_call_operand.vmem [shape: f32[1,32], index: 7, kind: input, shape index: {}]
  %s8 = inlined_call_operand.<no memory space> [shape: f32[1,1], index: 8, kind: input, shape index: {}]
  %s9 = inlined_call_operand.hbm [shape: f32[1,1024], index: 9, kind: output, shape index: {}]
  %s10 = sld [smem:[#allocation0]]
  $region46: #{deep_corrector_mlp.1} parent=0
    _
  %s12 = ssub.s32 1, %s10
  %s13 = scalar_select 0, %s12, %s10
  %v14 = vstv %s8
  %15 = vst [vmem:[#allocation2] sm:$0x1] %v14
  $region1: #{deep_corrector_mlp.1} parent=0
    #allocation3 [shape = 'u8[4096]{0}', space=vmem, size = 0x1000, scoped, tag = 'output window, operand 0, single buffered']
    #allocation4 [shape = 's32[1]{0}', space=sflag, size = 0x4, scoped, tag = 'scoped memory for deep_corrector_mlp.1']
    %16 = vsyncpa [#allocation4], 0
    // Predicated region
    $region2: #{deep_corrector_mlp.1} parent=1 // pred_check
      _
    $region3: #{deep_corrector_mlp.1} parent=1 // pred_check_branch
      %18 = sbr.rel (0) target = $region5
    $region4: #{deep_corrector_mlp.1} parent=1 // pred_region
      _
    $region5: #{deep_corrector_mlp.1} parent=1 // pred_fallthru
      _
    // Predicated region
    $region6: #{deep_corrector_mlp.1} parent=1 // pred_check
      _
    $region7: #{deep_corrector_mlp.1} parent=1 // pred_check_branch
      %20 = sbr.rel (0) target = $region9
    $region8: #{deep_corrector_mlp.1} parent=1 // pred_region
      _
    $region9: #{deep_corrector_mlp.1} parent=1 // pred_fallthru
      _
    // Predicated region
    $region10: #{deep_corrector_mlp.1} parent=1 // pred_check
      _
    $region11: #{deep_corrector_mlp.1} parent=1 // pred_check_branch
      %22 = sbr.rel (0) target = $region13
    $region12: #{deep_corrector_mlp.1} parent=1 // pred_region
      _
    $region13: #{deep_corrector_mlp.1} parent=1 // pred_fallthru
      _
    // Predicated region
    $region14: #{deep_corrector_mlp.1} parent=1 // pred_check
      _
    $region15: #{deep_corrector_mlp.1} parent=1 // pred_check_branch
      %24 = sbr.rel (0) target = $region17
    $region16: #{deep_corrector_mlp.1} parent=1 // pred_region
      _
    $region17: #{deep_corrector_mlp.1} parent=1 // pred_fallthru
      _
    // Predicated region
    $region18: #{deep_corrector_mlp.1} parent=1 // pred_check
      _
    $region19: #{deep_corrector_mlp.1} parent=1 // pred_check_branch
      %26 = sbr.rel (0) target = $region21
    $region20: #{deep_corrector_mlp.1} parent=1 // pred_region
      _
    $region21: #{deep_corrector_mlp.1} parent=1 // pred_fallthru
      _
    // Predicated region
    $region22: #{deep_corrector_mlp.1} parent=1 // pred_check
      _
    $region23: #{deep_corrector_mlp.1} parent=1 // pred_check_branch
      %28 = sbr.rel (0) target = $region25
    $region24: #{deep_corrector_mlp.1} parent=1 // pred_region
      _
    $region25: #{deep_corrector_mlp.1} parent=1 // pred_fallthru
      _
    // Predicated region
    $region26: #{deep_corrector_mlp.1} parent=1 // pred_check
      _
    $region27: #{deep_corrector_mlp.1} parent=1 // pred_check_branch
      %30 = sbr.rel (0) target = $region29
    $region28: #{deep_corrector_mlp.1} parent=1 // pred_region
      _
    $region29: #{deep_corrector_mlp.1} parent=1 // pred_fallthru
      _
    // Predicated region
    $region30: #{deep_corrector_mlp.1} parent=1 // pred_check
      _
    $region31: #{deep_corrector_mlp.1} parent=1 // pred_check_branch
      %32 = sbr.rel (0) target = $region33
    $region32: #{deep_corrector_mlp.1} parent=1 // pred_region
      _
    $region33: #{deep_corrector_mlp.1} parent=1 // pred_fallthru
      _
    // Predicated region
    $region34: #{deep_corrector_mlp.1} parent=1 // pred_check
      _
    $region35: #{deep_corrector_mlp.1} parent=1 // pred_check_branch
      %34 = sbr.rel (0) target = $region37
    $region36: #{deep_corrector_mlp.1} parent=1 // pred_region
      _
    $region37: #{deep_corrector_mlp.1} parent=1 // pred_fallthru
      _
    %v35 = vld [vmem:[%s0] sm:$0xff]
    %v36 = vld [vmem:[%s0 + $0x8] sm:$0xff]
    %v37 = vld [vmem:[%s0 + $0x10] sm:$0xff]
    %v38 = vld [vmem:[%s0 + $0x18] sm:$0xff]
    %v39 = vld [vmem:[%s0 + $0x20] sm:$0xff]
    %v40 = vld [vmem:[%s0 + $0x28] sm:$0xff]
    %v41 = vld [vmem:[%s0 + $0x30] sm:$0xff]
    %v42 = vld [vmem:[%s0 + $0x38] sm:$0xff]
    %v43 = vld [vmem:[%s0 + $0x40] sm:$0xff]
    %v44 = vld [vmem:[%s0 + $0x48] sm:$0xff]
    %v45 = vld [vmem:[%s0 + $0x50] sm:$0xff]
    %v46 = vld [vmem:[%s0 + $0x58] sm:$0xff]
    %v47 = vld [vmem:[%s0 + $0x60] sm:$0xff]
    %v48 = vld [vmem:[%s0 + $0x68] sm:$0xff]
    %v49 = vld [vmem:[%s0 + $0x70] sm:$0xff]
    %v50 = vld [vmem:[%s0 + $0x78] sm:$0xff]
    %v51 = vld [vmem:[%s0 + $0x80] sm:$0xff]
    %v52 = vld [vmem:[%s0 + $0x88] sm:$0xff]
    %v53 = vld [vmem:[%s0 + $0x90] sm:$0xff]
    %v54 = vld [vmem:[%s0 + $0x98] sm:$0xff]
    %v55 = vld [vmem:[%s0 + $0xa0] sm:$0xff]
    %v56 = vld [vmem:[%s0 + $0xa8] sm:$0xff]
    %v57 = vld [vmem:[%s0 + $0xb0] sm:$0xff]
    %v58 = vld [vmem:[%s0 + $0xb8] sm:$0xff]
    %v59 = vld [vmem:[%s0 + $0xc0] sm:$0xff]
    %v60 = vld [vmem:[%s0 + $0xc8] sm:$0xff]
    %v61 = vld [vmem:[%s0 + $0xd0] sm:$0xff]
    %v62 = vld [vmem:[%s0 + $0xd8] sm:$0xff]
    %v63 = vld [vmem:[%s0 + $0xe0] sm:$0xff]
    %v64 = vld [vmem:[%s0 + $0xe8] sm:$0xff]
    %v65 = vld [vmem:[%s0 + $0xf0] sm:$0xff]
    %v66 = vld [vmem:[%s0 + $0xf8] sm:$0xff]
    %v67 = vld [vmem:[%s0 + $0x100] sm:$0xff]
    %v68 = vld [vmem:[%s0 + $0x108] sm:$0xff]
    %v69 = vld [vmem:[%s0 + $0x110] sm:$0xff]
    %v70 = vld [vmem:[%s0 + $0x118] sm:$0xff]
    %v71 = vld [vmem:[%s0 + $0x120] sm:$0xff]
    %v72 = vld [vmem:[%s0 + $0x128] sm:$0xff]
    %v73 = vld [vmem:[%s0 + $0x130] sm:$0xff]
    %v74 = vld [vmem:[%s0 + $0x138] sm:$0xff]
    %v75 = vld [vmem:[%s0 + $0x140] sm:$0xff]
    %v76 = vld [vmem:[%s0 + $0x148] sm:$0xff]
    %v77 = vld [vmem:[%s0 + $0x150] sm:$0xff]
    %v78 = vld [vmem:[%s0 + $0x158] sm:$0xff]
    %v79 = vld [vmem:[%s0 + $0x160] sm:$0xff]
    %v80 = vld [vmem:[%s0 + $0x168] sm:$0xff]
    %v81 = vld [vmem:[%s0 + $0x170] sm:$0xff]
    %v82 = vld [vmem:[%s0 + $0x178] sm:$0xff]
    %v83 = vld [vmem:[%s0 + $0x180] sm:$0xff]
    %v84 = vld [vmem:[%s0 + $0x188] sm:$0xff]
    %v85 = vld [vmem:[%s0 + $0x190] sm:$0xff]
    %v86 = vld [vmem:[%s0 + $0x198] sm:$0xff]
    %v87 = vld [vmem:[%s0 + $0x1a0] sm:$0xff]
    %v88 = vld [vmem:[%s0 + $0x1a8] sm:$0xff]
    %v89 = vld [vmem:[%s0 + $0x1b0] sm:$0xff]
    %v90 = vld [vmem:[%s0 + $0x1b8] sm:$0xff]
    %v91 = vld [vmem:[%s0 + $0x1c0] sm:$0xff]
    %v92 = vld [vmem:[%s0 + $0x1c8] sm:$0xff]
    %v93 = vld [vmem:[%s0 + $0x1d0] sm:$0xff]
    %v94 = vld [vmem:[%s0 + $0x1d8] sm:$0xff]
    %v95 = vld [vmem:[%s0 + $0x1e0] sm:$0xff]
    %v96 = vld [vmem:[%s0 + $0x1e8] sm:$0xff]
    %v97 = vld [vmem:[%s0 + $0x1f0] sm:$0xff]
    %v98 = vld [vmem:[%s0 + $0x1f8] sm:$0xff]
    %v99 = vld [vmem:[%s0 + $0x200] sm:$0xff]
    %v100 = vld [vmem:[%s0 + $0x208] sm:$0xff]
    %v101 = vld [vmem:[%s0 + $0x210] sm:$0xff]
    %v102 = vld [vmem:[%s0 + $0x218] sm:$0xff]
    %v103 = vld [vmem:[%s0 + $0x220] sm:$0xff]
    %v104 = vld [vmem:[%s0 + $0x228] sm:$0xff]
    %v105 = vld [vmem:[%s0 + $0x230] sm:$0xff]
    %v106 = vld [vmem:[%s0 + $0x238] sm:$0xff]
    %v107 = vld [vmem:[%s0 + $0x240] sm:$0xff]
    %v108 = vld [vmem:[%s0 + $0x248] sm:$0xff]
    %v109 = vld [vmem:[%s0 + $0x250] sm:$0xff]
    %v110 = vld [vmem:[%s0 + $0x258] sm:$0xff]
    %v111 = vld [vmem:[%s0 + $0x260] sm:$0xff]
    %v112 = vld [vmem:[%s0 + $0x268] sm:$0xff]
    %v113 = vld [vmem:[%s0 + $0x270] sm:$0xff]
    %v114 = vld [vmem:[%s0 + $0x278] sm:$0xff]
    %v115 = vld [vmem:[%s0 + $0x280] sm:$0xff]
    %v116 = vld [vmem:[%s0 + $0x288] sm:$0xff]
    %v117 = vld [vmem:[%s0 + $0x290] sm:$0xff]
    %v118 = vld [vmem:[%s0 + $0x298] sm:$0xff]
    %v119 = vld [vmem:[%s0 + $0x2a0] sm:$0xff]
    %v120 = vld [vmem:[%s0 + $0x2a8] sm:$0xff]
    %v121 = vld [vmem:[%s0 + $0x2b0] sm:$0xff]
    %v122 = vld [vmem:[%s0 + $0x2b8] sm:$0xff]
    %v123 = vld [vmem:[%s0 + $0x2c0] sm:$0xff]
    %v124 = vld [vmem:[%s0 + $0x2c8] sm:$0xff]
    %v125 = vld [vmem:[%s0 + $0x2d0] sm:$0xff]
    %v126 = vld [vmem:[%s0 + $0x2d8] sm:$0xff]
    %v127 = vld [vmem:[%s0 + $0x2e0] sm:$0xff]
    %v128 = vld [vmem:[%s0 + $0x2e8] sm:$0xff]
    %v129 = vld [vmem:[%s0 + $0x2f0] sm:$0xff]
    %v130 = vld [vmem:[%s0 + $0x2f8] sm:$0xff]
    %v131 = vld [vmem:[%s0 + $0x300] sm:$0xff]
    %v132 = vld [vmem:[%s0 + $0x308] sm:$0xff]
    %v133 = vld [vmem:[%s0 + $0x310] sm:$0xff]
    %v134 = vld [vmem:[%s0 + $0x318] sm:$0xff]
    %v135 = vld [vmem:[%s0 + $0x320] sm:$0xff]
    %v136 = vld [vmem:[%s0 + $0x328] sm:$0xff]
    %v137 = vld [vmem:[%s0 + $0x330] sm:$0xff]
    %v138 = vld [vmem:[%s0 + $0x338] sm:$0xff]
    %v139 = vld [vmem:[%s0 + $0x340] sm:$0xff]
    %v140 = vld [vmem:[%s0 + $0x348] sm:$0xff]
    %v141 = vld [vmem:[%s0 + $0x350] sm:$0xff]
    %v142 = vld [vmem:[%s0 + $0x358] sm:$0xff]
    %v143 = vld [vmem:[%s0 + $0x360] sm:$0xff]
    %v144 = vld [vmem:[%s0 + $0x368] sm:$0xff]
    %v145 = vld [vmem:[%s0 + $0x370] sm:$0xff]
    %v146 = vld [vmem:[%s0 + $0x378] sm:$0xff]
    %v147 = vld [vmem:[%s0 + $0x380] sm:$0xff]
    %v148 = vld [vmem:[%s0 + $0x388] sm:$0xff]
    %v149 = vld [vmem:[%s0 + $0x390] sm:$0xff]
    %v150 = vld [vmem:[%s0 + $0x398] sm:$0xff]
    %v151 = vld [vmem:[%s0 + $0x3a0] sm:$0xff]
    %v152 = vld [vmem:[%s0 + $0x3a8] sm:$0xff]
    %v153 = vld [vmem:[%s0 + $0x3b0] sm:$0xff]
    %v154 = vld [vmem:[%s0 + $0x3b8] sm:$0xff]
    %v155 = vld [vmem:[%s0 + $0x3c0] sm:$0xff]
    %v156 = vld [vmem:[%s0 + $0x3c8] sm:$0xff]
    %v157 = vld [vmem:[%s0 + $0x3d0] sm:$0xff]
    %v158 = vld [vmem:[%s0 + $0x3d8] sm:$0xff]
    %v159 = vld [vmem:[%s0 + $0x3e0] sm:$0xff]
    %v160 = vld [vmem:[%s0 + $0x3e8] sm:$0xff]
    %v161 = vld [vmem:[%s0 + $0x3f0] sm:$0xff]
    %v162 = vld [vmem:[%s0 + $0x3f8] sm:$0xff]
    %v163 = vld [vmem:[%s1] sm:$0xff]
    %v164 = vld [vmem:[%s1 + $0x8] sm:$0xff]
    %v165 = vld [vmem:[%s1 + $0x10] sm:$0xff]
    %v166 = vld [vmem:[%s1 + $0x18] sm:$0xff]
    %v167 = vld [vmem:[%s2] sm:$0xff]
    %v168 = vld [vmem:[%s2 + $0x8] sm:$0xff]
    %v169 = vld [vmem:[%s2 + $0x10] sm:$0xff]
    %v170 = vld [vmem:[%s2 + $0x18] sm:$0xff]
    %172 = vset.pattern.permute.xlu0 0
    %173 = vperm.xlu0 %172, %v167
    %v174 = vpop.permute.xlu0 %173
    %177 = vset.pattern.permute.xlu0 0
    %178 = vperm.xlu0 %177, %v168
    %v179 = vpop.permute.xlu0 %178
    %182 = vset.pattern.permute.xlu0 0
    %183 = vperm.xlu0 %182, %v169
    %v184 = vpop.permute.xlu0 %183
    %187 = vset.pattern.permute.xlu0 0
    %188 = vperm.xlu0 %187, %v170
    %v189 = vpop.permute.xlu0 %188
    %vm191 = vcmask 31744
    %v193 = vsel %vm191, %v163, 0
    %v196 = vsel %vm191, %v164, 0
    %v199 = vsel %vm191, %v165, 0
    %v202 = vsel %vm191, %v166, 0
    %v205 = vsel %vm191, %v35, 0
    %v208 = vsel %vm191, %v36, 0
    %v211 = vsel %vm191, %v37, 0
    %v214 = vsel %vm191, %v38, 0
    %v217 = vsel %vm191, %v39, 0
    %v220 = vsel %vm191, %v40, 0
    %v223 = vsel %vm191, %v41, 0
    %v226 = vsel %vm191, %v42, 0
    %v229 = vsel %vm191, %v43, 0
    %v232 = vsel %vm191, %v44, 0
    %v235 = vsel %vm191, %v45, 0
    %v238 = vsel %vm191, %v46, 0
    %v241 = vsel %vm191, %v47, 0
    %v244 = vsel %vm191, %v48, 0
    %v247 = vsel %vm191, %v49, 0
    %v250 = vsel %vm191, %v50, 0
    %v253 = vsel %vm191, %v51, 0
    %v256 = vsel %vm191, %v52, 0
    %v259 = vsel %vm191, %v53, 0
    %v262 = vsel %vm191, %v54, 0
    %v265 = vsel %vm191, %v55, 0
    %v268 = vsel %vm191, %v56, 0
    %v271 = vsel %vm191, %v57, 0
    %v274 = vsel %vm191, %v58, 0
    %v277 = vsel %vm191, %v59, 0
    %v280 = vsel %vm191, %v60, 0
    %v283 = vsel %vm191, %v61, 0
    %v286 = vsel %vm191, %v62, 0
    %v289 = vsel %vm191, %v63, 0
    %v292 = vsel %vm191, %v64, 0
    %v295 = vsel %vm191, %v65, 0
    %v298 = vsel %vm191, %v66, 0
    %v301 = vsel %vm191, %v67, 0
    %v304 = vsel %vm191, %v68, 0
    %v307 = vsel %vm191, %v69, 0
    %v310 = vsel %vm191, %v70, 0
    %v313 = vsel %vm191, %v71, 0
    %v316 = vsel %vm191, %v72, 0
    %v319 = vsel %vm191, %v73, 0
    %v322 = vsel %vm191, %v74, 0
    %v325 = vsel %vm191, %v75, 0
    %v328 = vsel %vm191, %v76, 0
    %v331 = vsel %vm191, %v77, 0
    %v334 = vsel %vm191, %v78, 0
    %v337 = vsel %vm191, %v79, 0
    %v340 = vsel %vm191, %v80, 0
    %v343 = vsel %vm191, %v81, 0
    %v346 = vsel %vm191, %v82, 0
    %v349 = vsel %vm191, %v83, 0
    %v352 = vsel %vm191, %v84, 0
    %v355 = vsel %vm191, %v85, 0
    %v358 = vsel %vm191, %v86, 0
    %v361 = vsel %vm191, %v87, 0
    %v364 = vsel %vm191, %v88, 0
    %v367 = vsel %vm191, %v89, 0
    %v370 = vsel %vm191, %v90, 0
    %v373 = vsel %vm191, %v91, 0
    %v376 = vsel %vm191, %v92, 0
    %v379 = vsel %vm191, %v93, 0
    %v382 = vsel %vm191, %v94, 0
    %v385 = vsel %vm191, %v95, 0
    %v388 = vsel %vm191, %v96, 0
    %v391 = vsel %vm191, %v97, 0
    %v394 = vsel %vm191, %v98, 0
    %v397 = vsel %vm191, %v99, 0
    %v400 = vsel %vm191, %v100, 0
    %v403 = vsel %vm191, %v101, 0
    %v406 = vsel %vm191, %v102, 0
    %v409 = vsel %vm191, %v103, 0
    %v412 = vsel %vm191, %v104, 0
    %v415 = vsel %vm191, %v105, 0
    %v418 = vsel %vm191, %v106, 0
    %v421 = vsel %vm191, %v107, 0
    %v424 = vsel %vm191, %v108, 0
    %v427 = vsel %vm191, %v109, 0
    %v430 = vsel %vm191, %v110, 0
    %v433 = vsel %vm191, %v111, 0
    %v436 = vsel %vm191, %v112, 0
    %v439 = vsel %vm191, %v113, 0
    %v442 = vsel %vm191, %v114, 0
    %v445 = vsel %vm191, %v115, 0
    %v448 = vsel %vm191, %v116, 0
    %v451 = vsel %vm191, %v117, 0
    %v454 = vsel %vm191, %v118, 0
    %v457 = vsel %vm191, %v119, 0
    %v460 = vsel %vm191, %v120, 0
    %v463 = vsel %vm191, %v121, 0
    %v466 = vsel %vm191, %v122, 0
    %v469 = vsel %vm191, %v123, 0
    %v472 = vsel %vm191, %v124, 0
    %v475 = vsel %vm191, %v125, 0
    %v478 = vsel %vm191, %v126, 0
    %v481 = vsel %vm191, %v127, 0
    %v484 = vsel %vm191, %v128, 0
    %v487 = vsel %vm191, %v129, 0
    %v490 = vsel %vm191, %v130, 0
    %v493 = vsel %vm191, %v131, 0
    %v496 = vsel %vm191, %v132, 0
    %v499 = vsel %vm191, %v133, 0
    %v502 = vsel %vm191, %v134, 0
    %v505 = vsel %vm191, %v135, 0
    %v508 = vsel %vm191, %v136, 0
    %v511 = vsel %vm191, %v137, 0
    %v514 = vsel %vm191, %v138, 0
    %v517 = vsel %vm191, %v139, 0
    %v520 = vsel %vm191, %v140, 0
    %v523 = vsel %vm191, %v141, 0
    %v526 = vsel %vm191, %v142, 0
    %v529 = vsel %vm191, %v143, 0
    %v532 = vsel %vm191, %v144, 0
    %v535 = vsel %vm191, %v145, 0
    %v538 = vsel %vm191, %v146, 0
    %v541 = vsel %vm191, %v147, 0
    %v544 = vsel %vm191, %v148, 0
    %v547 = vsel %vm191, %v149, 0
    %v550 = vsel %vm191, %v150, 0
    %v553 = vsel %vm191, %v151, 0
    %v556 = vsel %vm191, %v152, 0
    %v559 = vsel %vm191, %v153, 0
    %v562 = vsel %vm191, %v154, 0
    %v565 = vsel %vm191, %v155, 0
    %v568 = vsel %vm191, %v156, 0
    %v571 = vsel %vm191, %v157, 0
    %v574 = vsel %vm191, %v158, 0
    %v577 = vsel %vm191, %v159, 0
    %v580 = vsel %vm191, %v160, 0
    %v583 = vsel %vm191, %v161, 0
    %v586 = vsel %vm191, %v162, 0
    %588 = vmatprep.subr.mxu0 0.0
    %589 = vmatpush1.xpose.msra.mxu0 %v205
    %590 = vmatprep.subr.mxu0 0.0
    %591 = vmatpush1.xpose.msra.mxu0 %v208
    %592 = vmatprep.subr.mxu0 0.0
    %593 = vmatpush1.xpose.msra.mxu0 %v211
    %594 = vmatprep.subr.mxu0 0.0
    %595 = vmatpush1.xpose.msra.mxu0 %v214
    %596 = vmatprep.subr.mxu0 0.0
    %597 = vmatpush1.xpose.msra.mxu0 %v217
    %598 = vmatprep.subr.mxu0 0.0
    %599 = vmatpush1.xpose.msra.mxu0 %v220
    %600 = vmatprep.subr.mxu0 0.0
    %601 = vmatpush1.xpose.msra.mxu0 %v223
    %602 = vmatprep.subr.mxu0 0.0
    %603 = vmatpush1.xpose.msra.mxu0 %v226
    %604 = vmatprep.subr.mxu0 0.0
    %605 = vmatpush1.xpose.msra.mxu0 %v229
    %606 = vmatprep.subr.mxu0 0.0
    %607 = vmatpush1.xpose.msra.mxu0 %v232
    %608 = vmatprep.subr.mxu0 0.0
    %609 = vmatpush1.xpose.msra.mxu0 %v235
    %610 = vmatprep.subr.mxu0 0.0
    %611 = vmatpush1.xpose.msra.mxu0 %v238
    %612 = vmatprep.subr.mxu0 0.0
    %613 = vmatpush1.xpose.msra.mxu0 %v241
    %614 = vmatprep.subr.mxu0 0.0
    %615 = vmatpush1.xpose.msra.mxu0 %v244
    %616 = vmatprep.subr.mxu0 0.0
    %617 = vmatpush1.xpose.msra.mxu0 %v247
    %618 = vmatprep.subr.mxu0 0.0
    %619 = vmatpush1.xpose.msra.mxu0 %v250
    %620 = vmatprep.subr.mxu0 0.0
    %621 = vmatpush1.xpose.msra.mxu0 %v253
    %622 = vmatprep.subr.mxu0 0.0
    %623 = vmatpush1.xpose.msra.mxu0 %v256
    %624 = vmatprep.subr.mxu0 0.0
    %625 = vmatpush1.xpose.msra.mxu0 %v259
    %626 = vmatprep.subr.mxu0 0.0
    %627 = vmatpush1.xpose.msra.mxu0 %v262
    %628 = vmatprep.subr.mxu0 0.0
    %629 = vmatpush1.xpose.msra.mxu0 %v265
    %630 = vmatprep.subr.mxu0 0.0
    %631 = vmatpush1.xpose.msra.mxu0 %v268
    %632 = vmatprep.subr.mxu0 0.0
    %633 = vmatpush1.xpose.msra.mxu0 %v271
    %634 = vmatprep.subr.mxu0 0.0
    %635 = vmatpush1.xpose.msra.mxu0 %v274
    %636 = vmatprep.subr.mxu0 0.0
    %637 = vmatpush1.xpose.msra.mxu0 %v277
    %638 = vmatprep.subr.mxu0 0.0
    %639 = vmatpush1.xpose.msra.mxu0 %v280
    %640 = vmatprep.subr.mxu0 0.0
    %641 = vmatpush1.xpose.msra.mxu0 %v283
    %642 = vmatprep.subr.mxu0 0.0
    %643 = vmatpush1.xpose.msra.mxu0 %v286
    %644 = vmatprep.subr.mxu0 0.0
    %645 = vmatpush1.xpose.msra.mxu0 %v289
    %646 = vmatprep.subr.mxu0 0.0
    %647 = vmatpush1.xpose.msra.mxu0 %v292
    %648 = vmatprep.subr.mxu0 0.0
    %649 = vmatpush1.xpose.msra.mxu0 %v295
    %650 = vmatprep.subr.mxu0 0.0
    %651 = vmatpush1.xpose.msra.mxu0 %v298
    %652 = vmatprep.mubr.f32.mxu0 0.0
    %653 = vmatmul.mubr.f32.gmra.mrb[0].mxu0 %v193
    %v654 = vpop.f32.mrb[0].mxu0
    %v655 = vadd.f32 %v174, %v654
    %v656 = vpop.f32.mrb[0].mxu0
    %v657 = vadd.f32 %v174, %v656
    %658 = vmatprep.mubr.f32.mxu0 0.0
    %659 = vmatmul.mubr.f32.gmra.mrb[0].mxu0 %v196
    %v660 = vpop.f32.mrb[0].mxu0
    %v661 = vadd.f32 %v179, %v660
    %v662 = vpop.f32.mrb[0].mxu0
    %v663 = vadd.f32 %v179, %v662
    %664 = vmatprep.mubr.f32.mxu0 0.0
    %665 = vmatmul.mubr.f32.gmra.mrb[0].mxu0 %v199
    %v666 = vpop.f32.mrb[0].mxu0
    %v667 = vadd.f32 %v184, %v666
    %v668 = vpop.f32.mrb[0].mxu0
    %v669 = vadd.f32 %v184, %v668
    %670 = vmatprep.mubr.f32.mxu0 0.0
    %671 = vmatmul.mubr.f32.gmra.mrb[0].mxu0 %v202
    %v672 = vpop.f32.mrb[0].mxu0
    %v673 = vadd.f32 %v189, %v672
    %v674 = vpop.f32.mrb[0].mxu0
    %v675 = vadd.f32 %v189, %v674
    %676 = vdwg.mxu0
    %677 = vmatprep.subr.mxu0 0.0
    %678 = vmatpush1.xpose.msra.mxu0 %v301
    %679 = vmatprep.subr.mxu0 0.0
    %680 = vmatpush1.xpose.msra.mxu0 %v304
    %681 = vmatprep.subr.mxu0 0.0
    %682 = vmatpush1.xpose.msra.mxu0 %v307
    %683 = vmatprep.subr.mxu0 0.0
    %684 = vmatpush1.xpose.msra.mxu0 %v310
    %685 = vmatprep.subr.mxu0 0.0
    %686 = vmatpush1.xpose.msra.mxu0 %v313
    %687 = vmatprep.subr.mxu0 0.0
    %688 = vmatpush1.xpose.msra.mxu0 %v316
    %689 = vmatprep.subr.mxu0 0.0
    %690 = vmatpush1.xpose.msra.mxu0 %v319
    %691 = vmatprep.subr.mxu0 0.0
    %692 = vmatpush1.xpose.msra.mxu0 %v322
    %693 = vmatprep.subr.mxu0 0.0
    %694 = vmatpush1.xpose.msra.mxu0 %v325
    %695 = vmatprep.subr.mxu0 0.0
    %696 = vmatpush1.xpose.msra.mxu0 %v328
    %697 = vmatprep.subr.mxu0 0.0
    %698 = vmatpush1.xpose.msra.mxu0 %v331
    %699 = vmatprep.subr.mxu0 0.0
    %700 = vmatpush1.xpose.msra.mxu0 %v334
    %701 = vmatprep.subr.mxu0 0.0
    %702 = vmatpush1.xpose.msra.mxu0 %v337
    %703 = vmatprep.subr.mxu0 0.0
    %704 = vmatpush1.xpose.msra.mxu0 %v340
    %705 = vmatprep.subr.mxu0 0.0
    %706 = vmatpush1.xpose.msra.mxu0 %v343
    %707 = vmatprep.subr.mxu0 0.0
    %708 = vmatpush1.xpose.msra.mxu0 %v346
    %709 = vmatprep.subr.mxu0 0.0
    %710 = vmatpush1.xpose.msra.mxu0 %v349
    %711 = vmatprep.subr.mxu0 0.0
    %712 = vmatpush1.xpose.msra.mxu0 %v352
    %713 = vmatprep.subr.mxu0 0.0
    %714 = vmatpush1.xpose.msra.mxu0 %v355
    %715 = vmatprep.subr.mxu0 0.0
    %716 = vmatpush1.xpose.msra.mxu0 %v358
    %717 = vmatprep.subr.mxu0 0.0
    %718 = vmatpush1.xpose.msra.mxu0 %v361
    %719 = vmatprep.subr.mxu0 0.0
    %720 = vmatpush1.xpose.msra.mxu0 %v364
    %721 = vmatprep.subr.mxu0 0.0
    %722 = vmatpush1.xpose.msra.mxu0 %v367
    %723 = vmatprep.subr.mxu0 0.0
    %724 = vmatpush1.xpose.msra.mxu0 %v370
    %725 = vmatprep.subr.mxu0 0.0
    %726 = vmatpush1.xpose.msra.mxu0 %v373
    %727 = vmatprep.subr.mxu0 0.0
    %728 = vmatpush1.xpose.msra.mxu0 %v376
    %729 = vmatprep.subr.mxu0 0.0
    %730 = vmatpush1.xpose.msra.mxu0 %v379
    %731 = vmatprep.subr.mxu0 0.0
    %732 = vmatpush1.xpose.msra.mxu0 %v382
    %733 = vmatprep.subr.mxu0 0.0
    %734 = vmatpush1.xpose.msra.mxu0 %v385
    %735 = vmatprep.subr.mxu0 0.0
    %736 = vmatpush1.xpose.msra.mxu0 %v388
    %737 = vmatprep.subr.mxu0 0.0
    %738 = vmatpush1.xpose.msra.mxu0 %v391
    %739 = vmatprep.subr.mxu0 0.0
    %740 = vmatpush1.xpose.msra.mxu0 %v394
    %741 = vmatprep.mubr.f32.mxu0 0.0
    %742 = vmatmul.mubr.f32.gmra.mrb[0].mxu0 %v193
    %v743 = vpop.f32.mrb[0].mxu0
    %v744 = vadd.f32 %v174, %v743
    %v745 = vpop.f32.mrb[0].mxu0
    %v746 = vadd.f32 %v174, %v745
    %747 = vmatprep.mubr.f32.mxu0 0.0
    %748 = vmatmul.mubr.f32.gmra.mrb[0].mxu0 %v196
    %v749 = vpop.f32.mrb[0].mxu0
    %v750 = vadd.f32 %v179, %v749
    %v751 = vpop.f32.mrb[0].mxu0
    %v752 = vadd.f32 %v179, %v751
    %753 = vmatprep.mubr.f32.mxu0 0.0
    %754 = vmatmul.mubr.f32.gmra.mrb[0].mxu0 %v199
    %v755 = vpop.f32.mrb[0].mxu0
    %v756 = vadd.f32 %v184, %v755
    %v757 = vpop.f32.mrb[0].mxu0
    %v758 = vadd.f32 %v184, %v757
    %759 = vmatprep.mubr.f32.mxu0 0.0
    %760 = vmatmul.mubr.f32.gmra.mrb[0].mxu0 %v202
    %v761 = vpop.f32.mrb[0].mxu0
    %v762 = vadd.f32 %v189, %v761
    %v763 = vpop.f32.mrb[0].mxu0
    %v764 = vadd.f32 %v189, %v763
    %765 = vdwg.mxu0
    %766 = vmatprep.subr.mxu0 0.0
    %767 = vmatpush1.xpose.msra.mxu0 %v397
    %768 = vmatprep.subr.mxu0 0.0
    %769 = vmatpush1.xpose.msra.mxu0 %v400
    %770 = vmatprep.subr.mxu0 0.0
    %771 = vmatpush1.xpose.msra.mxu0 %v403
    %772 = vmatprep.subr.mxu0 0.0
    %773 = vmatpush1.xpose.msra.mxu0 %v406
    %774 = vmatprep.subr.mxu0 0.0
    %775 = vmatpush1.xpose.msra.mxu0 %v409
    %776 = vmatprep.subr.mxu0 0.0
    %777 = vmatpush1.xpose.msra.mxu0 %v412
    %778 = vmatprep.subr.mxu0 0.0
    %779 = vmatpush1.xpose.msra.mxu0 %v415
    %780 = vmatprep.subr.mxu0 0.0
    %781 = vmatpush1.xpose.msra.mxu0 %v418
    %782 = vmatprep.subr.mxu0 0.0
    %783 = vmatpush1.xpose.msra.mxu0 %v421
    %784 = vmatprep.subr.mxu0 0.0
    %785 = vmatpush1.xpose.msra.mxu0 %v424
    %786 = vmatprep.subr.mxu0 0.0
    %787 = vmatpush1.xpose.msra.mxu0 %v427
    %788 = vmatprep.subr.mxu0 0.0
    %789 = vmatpush1.xpose.msra.mxu0 %v430
    %790 = vmatprep.subr.mxu0 0.0
    %791 = vmatpush1.xpose.msra.mxu0 %v433
    %792 = vmatprep.subr.mxu0 0.0
    %793 = vmatpush1.xpose.msra.mxu0 %v436
    %794 = vmatprep.subr.mxu0 0.0
    %795 = vmatpush1.xpose.msra.mxu0 %v439
    %796 = vmatprep.subr.mxu0 0.0
    %797 = vmatpush1.xpose.msra.mxu0 %v442
    %798 = vmatprep.subr.mxu0 0.0
    %799 = vmatpush1.xpose.msra.mxu0 %v445
    %800 = vmatprep.subr.mxu0 0.0
    %801 = vmatpush1.xpose.msra.mxu0 %v448
    %802 = vmatprep.subr.mxu0 0.0
    %803 = vmatpush1.xpose.msra.mxu0 %v451
    %804 = vmatprep.subr.mxu0 0.0
    %805 = vmatpush1.xpose.msra.mxu0 %v454
    %806 = vmatprep.subr.mxu0 0.0
    %807 = vmatpush1.xpose.msra.mxu0 %v457
    %808 = vmatprep.subr.mxu0 0.0
    %809 = vmatpush1.xpose.msra.mxu0 %v460
    %810 = vmatprep.subr.mxu0 0.0
    %811 = vmatpush1.xpose.msra.mxu0 %v463
    %812 = vmatprep.subr.mxu0 0.0
    %813 = vmatpush1.xpose.msra.mxu0 %v466
    %814 = vmatprep.subr.mxu0 0.0
    %815 = vmatpush1.xpose.msra.mxu0 %v469
    %816 = vmatprep.subr.mxu0 0.0
    %817 = vmatpush1.xpose.msra.mxu0 %v472
    %818 = vmatprep.subr.mxu0 0.0
    %819 = vmatpush1.xpose.msra.mxu0 %v475
    %820 = vmatprep.subr.mxu0 0.0
    %821 = vmatpush1.xpose.msra.mxu0 %v478
    %822 = vmatprep.subr.mxu0 0.0
    %823 = vmatpush1.xpose.msra.mxu0 %v481
    %824 = vmatprep.subr.mxu0 0.0
    %825 = vmatpush1.xpose.msra.mxu0 %v484
    %826 = vmatprep.subr.mxu0 0.0
    %827 = vmatpush1.xpose.msra.mxu0 %v487
    %828 = vmatprep.subr.mxu0 0.0
    %829 = vmatpush1.xpose.msra.mxu0 %v490
    %830 = vmatprep.mubr.f32.mxu0 0.0
    %831 = vmatmul.mubr.f32.gmra.mrb[0].mxu0 %v193
    %v832 = vpop.f32.mrb[0].mxu0
    %v833 = vadd.f32 %v174, %v832
    %v834 = vpop.f32.mrb[0].mxu0
    %v835 = vadd.f32 %v174, %v834
    %836 = vmatprep.mubr.f32.mxu0 0.0
    %837 = vmatmul.mubr.f32.gmra.mrb[0].mxu0 %v196
    %v838 = vpop.f32.mrb[0].mxu0
    %v839 = vadd.f32 %v179, %v838
    %v840 = vpop.f32.mrb[0].mxu0
    %v841 = vadd.f32 %v179, %v840
    %842 = vmatprep.mubr.f32.mxu0 0.0
    %843 = vmatmul.mubr.f32.gmra.mrb[0].mxu0 %v199
    %v844 = vpop.f32.mrb[0].mxu0
    %v845 = vadd.f32 %v184, %v844
    %v846 = vpop.f32.mrb[0].mxu0
    %v847 = vadd.f32 %v184, %v846
    %848 = vmatprep.mubr.f32.mxu0 0.0
    %849 = vmatmul.mubr.f32.gmra.mrb[0].mxu0 %v202
    %v850 = vpop.f32.mrb[0].mxu0
    %v851 = vadd.f32 %v189, %v850
    %v852 = vpop.f32.mrb[0].mxu0
    %v853 = vadd.f32 %v189, %v852
    %854 = vdwg.mxu0
    %855 = vmatprep.subr.mxu0 0.0
    %856 = vmatpush1.xpose.msra.mxu0 %v493
    %857 = vmatprep.subr.mxu0 0.0
    %858 = vmatpush1.xpose.msra.mxu0 %v496
    %859 = vmatprep.subr.mxu0 0.0
    %860 = vmatpush1.xpose.msra.mxu0 %v499
    %861 = vmatprep.subr.mxu0 0.0
    %862 = vmatpush1.xpose.msra.mxu0 %v502
    %863 = vmatprep.subr.mxu0 0.0
    %864 = vmatpush1.xpose.msra.mxu0 %v505
    %865 = vmatprep.subr.mxu0 0.0
    %866 = vmatpush1.xpose.msra.mxu0 %v508
    %867 = vmatprep.subr.mxu0 0.0
    %868 = vmatpush1.xpose.msra.mxu0 %v511
    %869 = vmatprep.subr.mxu0 0.0
    %870 = vmatpush1.xpose.msra.mxu0 %v514
    %871 = vmatprep.subr.mxu0 0.0
    %872 = vmatpush1.xpose.msra.mxu0 %v517
    %873 = vmatprep.subr.mxu0 0.0
    %874 = vmatpush1.xpose.msra.mxu0 %v520
    %875 = vmatprep.subr.mxu0 0.0
    %876 = vmatpush1.xpose.msra.mxu0 %v523
    %877 = vmatprep.subr.mxu0 0.0
    %878 = vmatpush1.xpose.msra.mxu0 %v526
    %879 = vmatprep.subr.mxu0 0.0
    %880 = vmatpush1.xpose.msra.mxu0 %v529
    %881 = vmatprep.subr.mxu0 0.0
    %882 = vmatpush1.xpose.msra.mxu0 %v532
    %883 = vmatprep.subr.mxu0 0.0
    %884 = vmatpush1.xpose.msra.mxu0 %v535
    %885 = vmatprep.subr.mxu0 0.0
    %886 = vmatpush1.xpose.msra.mxu0 %v538
    %887 = vmatprep.subr.mxu0 0.0
    %888 = vmatpush1.xpose.msra.mxu0 %v541
    %889 = vmatprep.subr.mxu0 0.0
    %890 = vmatpush1.xpose.msra.mxu0 %v544
    %891 = vmatprep.subr.mxu0 0.0
    %892 = vmatpush1.xpose.msra.mxu0 %v547
    %893 = vmatprep.subr.mxu0 0.0
    %894 = vmatpush1.xpose.msra.mxu0 %v550
    %895 = vmatprep.subr.mxu0 0.0
    %896 = vmatpush1.xpose.msra.mxu0 %v553
    %897 = vmatprep.subr.mxu0 0.0
    %898 = vmatpush1.xpose.msra.mxu0 %v556
    %899 = vmatprep.subr.mxu0 0.0
    %900 = vmatpush1.xpose.msra.mxu0 %v559
    %901 = vmatprep.subr.mxu0 0.0
    %902 = vmatpush1.xpose.msra.mxu0 %v562
    %903 = vmatprep.subr.mxu0 0.0
    %904 = vmatpush1.xpose.msra.mxu0 %v565
    %905 = vmatprep.subr.mxu0 0.0
    %906 = vmatpush1.xpose.msra.mxu0 %v568
    %907 = vmatprep.subr.mxu0 0.0
    %908 = vmatpush1.xpose.msra.mxu0 %v571
    %909 = vmatprep.subr.mxu0 0.0
    %910 = vmatpush1.xpose.msra.mxu0 %v574
    %911 = vmatprep.subr.mxu0 0.0
    %912 = vmatpush1.xpose.msra.mxu0 %v577
    %913 = vmatprep.subr.mxu0 0.0
    %914 = vmatpush1.xpose.msra.mxu0 %v580
    %915 = vmatprep.subr.mxu0 0.0
    %916 = vmatpush1.xpose.msra.mxu0 %v583
    %917 = vmatprep.subr.mxu0 0.0
    %918 = vmatpush1.xpose.msra.mxu0 %v586
    %919 = vmatprep.mubr.f32.mxu0 0.0
    %920 = vmatmul.mubr.f32.gmra.mrb[0].mxu0 %v193
    %v921 = vpop.f32.mrb[0].mxu0
    %v922 = vadd.f32 %v174, %v921
    %v923 = vpop.f32.mrb[0].mxu0
    %v924 = vadd.f32 %v174, %v923
    %925 = vmatprep.mubr.f32.mxu0 0.0
    %926 = vmatmul.mubr.f32.gmra.mrb[0].mxu0 %v196
    %v927 = vpop.f32.mrb[0].mxu0
    %v928 = vadd.f32 %v179, %v927
    %v929 = vpop.f32.mrb[0].mxu0
    %v930 = vadd.f32 %v179, %v929
    %931 = vmatprep.mubr.f32.mxu0 0.0
    %932 = vmatmul.mubr.f32.gmra.mrb[0].mxu0 %v199
    %v933 = vpop.f32.mrb[0].mxu0
    %v934 = vadd.f32 %v184, %v933
    %v935 = vpop.f32.mrb[0].mxu0
    %v936 = vadd.f32 %v184, %v935
    %937 = vmatprep.mubr.f32.mxu0 0.0
    %938 = vmatmul.mubr.f32.gmra.mrb[0].mxu0 %v202
    %v939 = vpop.f32.mrb[0].mxu0
    %v940 = vadd.f32 %v189, %v939
    %v941 = vpop.f32.mrb[0].mxu0
    %v942 = vadd.f32 %v189, %v941
    %943 = vdwg.mxu0
    %v944 = vmax.f32 %v655, 0.0
    %v945 = vmax.f32 %v657, 0.0
    %v946 = vmax.f32 %v744, 0.0
    %v947 = vmax.f32 %v746, 0.0
    %v948 = vmax.f32 %v833, 0.0
    %v949 = vmax.f32 %v835, 0.0
    %v950 = vmax.f32 %v922, 0.0
    %v951 = vmax.f32 %v924, 0.0
    %v952 = vmax.f32 %v661, 0.0
    %v953 = vmax.f32 %v663, 0.0
    %v954 = vmax.f32 %v750, 0.0
    %v955 = vmax.f32 %v752, 0.0
    %v956 = vmax.f32 %v839, 0.0
    %v957 = vmax.f32 %v841, 0.0
    %v958 = vmax.f32 %v928, 0.0
    %v959 = vmax.f32 %v930, 0.0
    %v960 = vmax.f32 %v667, 0.0
    %v961 = vmax.f32 %v669, 0.0
    %v962 = vmax.f32 %v756, 0.0
    %v963 = vmax.f32 %v758, 0.0
    %v964 = vmax.f32 %v845, 0.0
    %v965 = vmax.f32 %v847, 0.0
    %v966 = vmax.f32 %v934, 0.0
    %v967 = vmax.f32 %v936, 0.0
    %v968 = vmax.f32 %v673, 0.0
    %v969 = vmax.f32 %v675, 0.0
    %v970 = vmax.f32 %v762, 0.0
    %v971 = vmax.f32 %v764, 0.0
    %v972 = vmax.f32 %v851, 0.0
    %v973 = vmax.f32 %v853, 0.0
    %v974 = vmax.f32 %v940, 0.0
    %v975 = vmax.f32 %v942, 0.0
    %v976 = vld [vmem:[%s3] sm:$0xff]
    %v977 = vld [vmem:[%s3 + $0x8] sm:$0xff]
    %v978 = vld [vmem:[%s3 + $0x10] sm:$0xff]
    %v979 = vld [vmem:[%s3 + $0x18] sm:$0xff]
    %v980 = vld [vmem:[%s4] sm:$0xff]
    %v981 = vld [vmem:[%s4 + $0x8] sm:$0xff]
    %v982 = vld [vmem:[%s4 + $0x10] sm:$0xff]
    %v983 = vld [vmem:[%s4 + $0x18] sm:$0xff]
    %985 = vset.pattern.permute.xlu0 0
    %986 = vperm.xlu0 %985, %v980
    %v987 = vpop.permute.xlu0 %986
    %990 = vset.pattern.permute.xlu0 0
    %991 = vperm.xlu0 %990, %v981
    %v992 = vpop.permute.xlu0 %991
    %995 = vset.pattern.permute.xlu0 0
    %996 = vperm.xlu0 %995, %v982
    %v997 = vpop.permute.xlu0 %996
    %1000 = vset.pattern.permute.xlu0 0
    %1001 = vperm.xlu0 %1000, %v983
    %v1002 = vpop.permute.xlu0 %1001
    %vm1004 = vcmask 261120
    %v1006 = vsel %vm1004, %v976, 0
    %v1009 = vsel %vm1004, %v977, 0
    %v1012 = vsel %vm1004, %v978, 0
    %v1015 = vsel %vm1004, %v979, 0
    %1017 = vmatprep.subr.mxu0 %v945
    %1018 = vmatpush1.msra.mxu0 %v944
    %1019 = vmatprep.subr.mxu0 %v953
    %1020 = vmatpush1.msra.mxu0 %v952
    %1021 = vmatprep.subr.mxu0 %v961
    %1022 = vmatpush1.msra.mxu0 %v960
    %1023 = vmatprep.subr.mxu0 %v969
    %1024 = vmatpush1.msra.mxu0 %v968
    %1025 = vmatprep.subr.mxu0 0.0
    %1026 = vmatpush1.msra.mxu0 0.0
    %1027 = vmatprep.subr.mxu0 0.0
    %1028 = vmatpush1.msra.mxu0 0.0
    %1029 = vmatprep.subr.mxu0 0.0
    %1030 = vmatpush1.msra.mxu0 0.0
    %1031 = vmatprep.subr.mxu0 0.0
    %1032 = vmatpush1.msra.mxu0 0.0
    %1033 = vmatprep.subr.mxu0 0.0
    %1034 = vmatpush1.msra.mxu0 0.0
    %1035 = vmatprep.subr.mxu0 0.0
    %1036 = vmatpush1.msra.mxu0 0.0
    %1037 = vmatprep.subr.mxu0 0.0
    %1038 = vmatpush1.msra.mxu0 0.0
    %1039 = vmatprep.subr.mxu0 0.0
    %1040 = vmatpush1.msra.mxu0 0.0
    %1041 = vmatprep.subr.mxu0 0.0
    %1042 = vmatpush1.msra.mxu0 0.0
    %1043 = vmatprep.subr.mxu0 0.0
    %1044 = vmatpush1.msra.mxu0 0.0
    %1045 = vmatprep.subr.mxu0 0.0
    %1046 = vmatpush1.msra.mxu0 0.0
    %1047 = vmatprep.subr.mxu0 0.0
    %1048 = vmatpush1.msra.mxu0 0.0
    %1049 = vmatprep.subr.mxu0 0.0
    %1050 = vmatpush1.msra.mxu0 0.0
    %1051 = vmatprep.subr.mxu0 0.0
    %1052 = vmatpush1.msra.mxu0 0.0
    %1053 = vmatprep.subr.mxu0 0.0
    %1054 = vmatpush1.msra.mxu0 0.0
    %1055 = vmatprep.subr.mxu0 0.0
    %1056 = vmatpush1.msra.mxu0 0.0
    %1057 = vmatprep.subr.mxu0 0.0
    %1058 = vmatpush1.msra.mxu0 0.0
    %1059 = vmatprep.subr.mxu0 0.0
    %1060 = vmatpush1.msra.mxu0 0.0
    %1061 = vmatprep.subr.mxu0 0.0
    %1062 = vmatpush1.msra.mxu0 0.0
    %1063 = vmatprep.subr.mxu0 0.0
    %1064 = vmatpush1.msra.mxu0 0.0
    %1065 = vmatprep.subr.mxu0 0.0
    %1066 = vmatpush1.msra.mxu0 0.0
    %1067 = vmatprep.subr.mxu0 0.0
    %1068 = vmatpush1.msra.mxu0 0.0
    %1069 = vmatprep.subr.mxu0 0.0
    %1070 = vmatpush1.msra.mxu0 0.0
    %1071 = vmatprep.subr.mxu0 0.0
    %1072 = vmatpush1.msra.mxu0 0.0
    %1073 = vmatprep.subr.mxu0 0.0
    %1074 = vmatpush1.msra.mxu0 0.0
    %1075 = vmatprep.subr.mxu0 0.0
    %1076 = vmatpush1.msra.mxu0 0.0
    %1077 = vmatprep.subr.mxu0 0.0
    %1078 = vmatpush1.msra.mxu0 0.0
    %1079 = vmatprep.subr.mxu0 0.0
    %1080 = vmatpush1.msra.mxu0 0.0
    %1081 = vmatprep.mubr.f32.mxu0 0.0
    %1082 = vmatmul.mubr.f32.gmra.mrb[0].mxu0 %v1006
    %v1083 = vpop.f32.mrb[0].mxu0
    %v1084 = vadd.f32 %v987, %v1083
    %v1085 = vpop.f32.mrb[0].mxu0
    %v1086 = vadd.f32 %v987, %v1085
    %1087 = vmatprep.mubr.f32.mxu0 0.0
    %1088 = vmatmul.mubr.f32.gmra.mrb[0].mxu0 %v1009
    %v1089 = vpop.f32.mrb[0].mxu0
    %v1090 = vadd.f32 %v992, %v1089
    %v1091 = vpop.f32.mrb[0].mxu0
    %v1092 = vadd.f32 %v992, %v1091
    %1093 = vmatprep.mubr.f32.mxu0 0.0
    %1094 = vmatmul.mubr.f32.gmra.mrb[0].mxu0 %v1012
    %v1095 = vpop.f32.mrb[0].mxu0
    %v1096 = vadd.f32 %v997, %v1095
    %v1097 = vpop.f32.mrb[0].mxu0
    %v1098 = vadd.f32 %v997, %v1097
    %1099 = vmatprep.mubr.f32.mxu0 0.0
    %1100 = vmatmul.mubr.f32.gmra.mrb[0].mxu0 %v1015
    %v1101 = vpop.f32.mrb[0].mxu0
    %v1102 = vadd.f32 %v1002, %v1101
    %v1103 = vpop.f32.mrb[0].mxu0
    %v1104 = vadd.f32 %v1002, %v1103
    %1105 = vdwg.mxu0
    %1106 = vmatprep.subr.mxu0 %v947
    %1107 = vmatpush1.msra.mxu0 %v946
    %1108 = vmatprep.subr.mxu0 %v955
    %1109 = vmatpush1.msra.mxu0 %v954
    %1110 = vmatprep.subr.mxu0 %v963
    %1111 = vmatpush1.msra.mxu0 %v962
    %1112 = vmatprep.subr.mxu0 %v971
    %1113 = vmatpush1.msra.mxu0 %v970
    %1114 = vmatprep.subr.mxu0 0.0
    %1115 = vmatpush1.msra.mxu0 0.0
    %1116 = vmatprep.subr.mxu0 0.0
    %1117 = vmatpush1.msra.mxu0 0.0
    %1118 = vmatprep.subr.mxu0 0.0
    %1119 = vmatpush1.msra.mxu0 0.0
    %1120 = vmatprep.subr.mxu0 0.0
    %1121 = vmatpush1.msra.mxu0 0.0
    %1122 = vmatprep.subr.mxu0 0.0
    %1123 = vmatpush1.msra.mxu0 0.0
    %1124 = vmatprep.subr.mxu0 0.0
    %1125 = vmatpush1.msra.mxu0 0.0
    %1126 = vmatprep.subr.mxu0 0.0
    %1127 = vmatpush1.msra.mxu0 0.0
    %1128 = vmatprep.subr.mxu0 0.0
    %1129 = vmatpush1.msra.mxu0 0.0
    %1130 = vmatprep.subr.mxu0 0.0
    %1131 = vmatpush1.msra.mxu0 0.0
    %1132 = vmatprep.subr.mxu0 0.0
    %1133 = vmatpush1.msra.mxu0 0.0
    %1134 = vmatprep.subr.mxu0 0.0
    %1135 = vmatpush1.msra.mxu0 0.0
    %1136 = vmatprep.subr.mxu0 0.0
    %1137 = vmatpush1.msra.mxu0 0.0
    %1138 = vmatprep.subr.mxu0 0.0
    %1139 = vmatpush1.msra.mxu0 0.0
    %1140 = vmatprep.subr.mxu0 0.0
    %1141 = vmatpush1.msra.mxu0 0.0
    %1142 = vmatprep.subr.mxu0 0.0
    %1143 = vmatpush1.msra.mxu0 0.0
    %1144 = vmatprep.subr.mxu0 0.0
    %1145 = vmatpush1.msra.mxu0 0.0
    %1146 = vmatprep.subr.mxu0 0.0
    %1147 = vmatpush1.msra.mxu0 0.0
    %1148 = vmatprep.subr.mxu0 0.0
    %1149 = vmatpush1.msra.mxu0 0.0
    %1150 = vmatprep.subr.mxu0 0.0
    %1151 = vmatpush1.msra.mxu0 0.0
    %1152 = vmatprep.subr.mxu0 0.0
    %1153 = vmatpush1.msra.mxu0 0.0
    %1154 = vmatprep.subr.mxu0 0.0
    %1155 = vmatpush1.msra.mxu0 0.0
    %1156 = vmatprep.subr.mxu0 0.0
    %1157 = vmatpush1.msra.mxu0 0.0
    %1158 = vmatprep.subr.mxu0 0.0
    %1159 = vmatpush1.msra.mxu0 0.0
    %1160 = vmatprep.subr.mxu0 0.0
    %1161 = vmatpush1.msra.mxu0 0.0
    %1162 = vmatprep.subr.mxu0 0.0
    %1163 = vmatpush1.msra.mxu0 0.0
    %1164 = vmatprep.subr.mxu0 0.0
    %1165 = vmatpush1.msra.mxu0 0.0
    %1166 = vmatprep.subr.mxu0 0.0
    %1167 = vmatpush1.msra.mxu0 0.0
    %1168 = vmatprep.subr.mxu0 0.0
    %1169 = vmatpush1.msra.mxu0 0.0
    %1170 = vmatprep.mubr.f32.mxu0 0.0
    %1171 = vmatmul.mubr.f32.gmra.mrb[0].mxu0 %v1006
    %v1172 = vpop.f32.mrb[0].mxu0
    %v1173 = vadd.f32 %v987, %v1172
    %v1174 = vpop.f32.mrb[0].mxu0
    %v1175 = vadd.f32 %v987, %v1174
    %1176 = vmatprep.mubr.f32.mxu0 0.0
    %1177 = vmatmul.mubr.f32.gmra.mrb[0].mxu0 %v1009
    %v1178 = vpop.f32.mrb[0].mxu0
    %v1179 = vadd.f32 %v992, %v1178
    %v1180 = vpop.f32.mrb[0].mxu0
    %v1181 = vadd.f32 %v992, %v1180
    %1182 = vmatprep.mubr.f32.mxu0 0.0
    %1183 = vmatmul.mubr.f32.gmra.mrb[0].mxu0 %v1012
    %v1184 = vpop.f32.mrb[0].mxu0
    %v1185 = vadd.f32 %v997, %v1184
    %v1186 = vpop.f32.mrb[0].mxu0
    %v1187 = vadd.f32 %v997, %v1186
    %1188 = vmatprep.mubr.f32.mxu0 0.0
    %1189 = vmatmul.mubr.f32.gmra.mrb[0].mxu0 %v1015
    %v1190 = vpop.f32.mrb[0].mxu0
    %v1191 = vadd.f32 %v1002, %v1190
    %v1192 = vpop.f32.mrb[0].mxu0
    %v1193 = vadd.f32 %v1002, %v1192
    %1194 = vdwg.mxu0
    %1195 = vmatprep.subr.mxu0 %v949
    %1196 = vmatpush1.msra.mxu0 %v948
    %1197 = vmatprep.subr.mxu0 %v957
    %1198 = vmatpush1.msra.mxu0 %v956
    %1199 = vmatprep.subr.mxu0 %v965
    %1200 = vmatpush1.msra.mxu0 %v964
    %1201 = vmatprep.subr.mxu0 %v973
    %1202 = vmatpush1.msra.mxu0 %v972
    %1203 = vmatprep.subr.mxu0 0.0
    %1204 = vmatpush1.msra.mxu0 0.0
    %1205 = vmatprep.subr.mxu0 0.0
    %1206 = vmatpush1.msra.mxu0 0.0
    %1207 = vmatprep.subr.mxu0 0.0
    %1208 = vmatpush1.msra.mxu0 0.0
    %1209 = vmatprep.subr.mxu0 0.0
    %1210 = vmatpush1.msra.mxu0 0.0
    %1211 = vmatprep.subr.mxu0 0.0
    %1212 = vmatpush1.msra.mxu0 0.0
    %1213 = vmatprep.subr.mxu0 0.0
    %1214 = vmatpush1.msra.mxu0 0.0
    %1215 = vmatprep.subr.mxu0 0.0
    %1216 = vmatpush1.msra.mxu0 0.0
    %1217 = vmatprep.subr.mxu0 0.0
    %1218 = vmatpush1.msra.mxu0 0.0
    %1219 = vmatprep.subr.mxu0 0.0
    %1220 = vmatpush1.msra.mxu0 0.0
    %1221 = vmatprep.subr.mxu0 0.0
    %1222 = vmatpush1.msra.mxu0 0.0
    %1223 = vmatprep.subr.mxu0 0.0
    %1224 = vmatpush1.msra.mxu0 0.0
    %1225 = vmatprep.subr.mxu0 0.0
    %1226 = vmatpush1.msra.mxu0 0.0
    %1227 = vmatprep.subr.mxu0 0.0
    %1228 = vmatpush1.msra.mxu0 0.0
    %1229 = vmatprep.subr.mxu0 0.0
    %1230 = vmatpush1.msra.mxu0 0.0
    %1231 = vmatprep.subr.mxu0 0.0
    %1232 = vmatpush1.msra.mxu0 0.0
    %1233 = vmatprep.subr.mxu0 0.0
    %1234 = vmatpush1.msra.mxu0 0.0
    %1235 = vmatprep.subr.mxu0 0.0
    %1236 = vmatpush1.msra.mxu0 0.0
    %1237 = vmatprep.subr.mxu0 0.0
    %1238 = vmatpush1.msra.mxu0 0.0
    %1239 = vmatprep.subr.mxu0 0.0
    %1240 = vmatpush1.msra.mxu0 0.0
    %1241 = vmatprep.subr.mxu0 0.0
    %1242 = vmatpush1.msra.mxu0 0.0
    %1243 = vmatprep.subr.mxu0 0.0
    %1244 = vmatpush1.msra.mxu0 0.0
    %1245 = vmatprep.subr.mxu0 0.0
    %1246 = vmatpush1.msra.mxu0 0.0
    %1247 = vmatprep.subr.mxu0 0.0
    %1248 = vmatpush1.msra.mxu0 0.0
    %1249 = vmatprep.subr.mxu0 0.0
    %1250 = vmatpush1.msra.mxu0 0.0
    %1251 = vmatprep.subr.mxu0 0.0
    %1252 = vmatpush1.msra.mxu0 0.0
    %1253 = vmatprep.subr.mxu0 0.0
    %1254 = vmatpush1.msra.mxu0 0.0
    %1255 = vmatprep.subr.mxu0 0.0
    %1256 = vmatpush1.msra.mxu0 0.0
    %1257 = vmatprep.subr.mxu0 0.0
    %1258 = vmatpush1.msra.mxu0 0.0
    %1259 = vmatprep.mubr.f32.mxu0 0.0
    %1260 = vmatmul.mubr.f32.gmra.mrb[0].mxu0 %v1006
    %v1261 = vpop.f32.mrb[0].mxu0
    %v1262 = vadd.f32 %v987, %v1261
    %v1263 = vpop.f32.mrb[0].mxu0
    %v1264 = vadd.f32 %v987, %v1263
    %1265 = vmatprep.mubr.f32.mxu0 0.0
    %1266 = vmatmul.mubr.f32.gmra.mrb[0].mxu0 %v1009
    %v1267 = vpop.f32.mrb[0].mxu0
    %v1268 = vadd.f32 %v992, %v1267
    %v1269 = vpop.f32.mrb[0].mxu0
    %v1270 = vadd.f32 %v992, %v1269
    %1271 = vmatprep.mubr.f32.mxu0 0.0
    %1272 = vmatmul.mubr.f32.gmra.mrb[0].mxu0 %v1012
    %v1273 = vpop.f32.mrb[0].mxu0
    %v1274 = vadd.f32 %v997, %v1273
    %v1275 = vpop.f32.mrb[0].mxu0
    %v1276 = vadd.f32 %v997, %v1275
    %1277 = vmatprep.mubr.f32.mxu0 0.0
    %1278 = vmatmul.mubr.f32.gmra.mrb[0].mxu0 %v1015
    %v1279 = vpop.f32.mrb[0].mxu0
    %v1280 = vadd.f32 %v1002, %v1279
    %v1281 = vpop.f32.mrb[0].mxu0
    %v1282 = vadd.f32 %v1002, %v1281
    %1283 = vdwg.mxu0
    %1284 = vmatprep.subr.mxu0 %v951
    %1285 = vmatpush1.msra.mxu0 %v950
    %1286 = vmatprep.subr.mxu0 %v959
    %1287 = vmatpush1.msra.mxu0 %v958
    %1288 = vmatprep.subr.mxu0 %v967
    %1289 = vmatpush1.msra.mxu0 %v966
    %1290 = vmatprep.subr.mxu0 %v975
    %1291 = vmatpush1.msra.mxu0 %v974
    %1292 = vmatprep.subr.mxu0 0.0
    %1293 = vmatpush1.msra.mxu0 0.0
    %1294 = vmatprep.subr.mxu0 0.0
    %1295 = vmatpush1.msra.mxu0 0.0
    %1296 = vmatprep.subr.mxu0 0.0
    %1297 = vmatpush1.msra.mxu0 0.0
    %1298 = vmatprep.subr.mxu0 0.0
    %1299 = vmatpush1.msra.mxu0 0.0
    %1300 = vmatprep.subr.mxu0 0.0
    %1301 = vmatpush1.msra.mxu0 0.0
    %1302 = vmatprep.subr.mxu0 0.0
    %1303 = vmatpush1.msra.mxu0 0.0
    %1304 = vmatprep.subr.mxu0 0.0
    %1305 = vmatpush1.msra.mxu0 0.0
    %1306 = vmatprep.subr.mxu0 0.0
    %1307 = vmatpush1.msra.mxu0 0.0
    %1308 = vmatprep.subr.mxu0 0.0
    %1309 = vmatpush1.msra.mxu0 0.0
    %1310 = vmatprep.subr.mxu0 0.0
    %1311 = vmatpush1.msra.mxu0 0.0
    %1312 = vmatprep.subr.mxu0 0.0
    %1313 = vmatpush1.msra.mxu0 0.0
    %1314 = vmatprep.subr.mxu0 0.0
    %1315 = vmatpush1.msra.mxu0 0.0
    %1316 = vmatprep.subr.mxu0 0.0
    %1317 = vmatpush1.msra.mxu0 0.0
    %1318 = vmatprep.subr.mxu0 0.0
    %1319 = vmatpush1.msra.mxu0 0.0
    %1320 = vmatprep.subr.mxu0 0.0
    %1321 = vmatpush1.msra.mxu0 0.0
    %1322 = vmatprep.subr.mxu0 0.0
    %1323 = vmatpush1.msra.mxu0 0.0
    %1324 = vmatprep.subr.mxu0 0.0
    %1325 = vmatpush1.msra.mxu0 0.0
    %1326 = vmatprep.subr.mxu0 0.0
    %1327 = vmatpush1.msra.mxu0 0.0
    %1328 = vmatprep.subr.mxu0 0.0
    %1329 = vmatpush1.msra.mxu0 0.0
    %1330 = vmatprep.subr.mxu0 0.0
    %1331 = vmatpush1.msra.mxu0 0.0
    %1332 = vmatprep.subr.mxu0 0.0
    %1333 = vmatpush1.msra.mxu0 0.0
    %1334 = vmatprep.subr.mxu0 0.0
    %1335 = vmatpush1.msra.mxu0 0.0
    %1336 = vmatprep.subr.mxu0 0.0
    %1337 = vmatpush1.msra.mxu0 0.0
    %1338 = vmatprep.subr.mxu0 0.0
    %1339 = vmatpush1.msra.mxu0 0.0
    %1340 = vmatprep.subr.mxu0 0.0
    %1341 = vmatpush1.msra.mxu0 0.0
    %1342 = vmatprep.subr.mxu0 0.0
    %1343 = vmatpush1.msra.mxu0 0.0
    %1344 = vmatprep.subr.mxu0 0.0
    %1345 = vmatpush1.msra.mxu0 0.0
    %1346 = vmatprep.subr.mxu0 0.0
    %1347 = vmatpush1.msra.mxu0 0.0
    %1348 = vmatprep.mubr.f32.mxu0 0.0
    %1349 = vmatmul.mubr.f32.gmra.mrb[0].mxu0 %v1006
    %v1350 = vpop.f32.mrb[0].mxu0
    %v1351 = vadd.f32 %v987, %v1350
    %v1352 = vpop.f32.mrb[0].mxu0
    %v1353 = vadd.f32 %v987, %v1352
    %1354 = vmatprep.mubr.f32.mxu0 0.0
    %1355 = vmatmul.mubr.f32.gmra.mrb[0].mxu0 %v1009
    %v1356 = vpop.f32.mrb[0].mxu0
    %v1357 = vadd.f32 %v992, %v1356
    %v1358 = vpop.f32.mrb[0].mxu0
    %v1359 = vadd.f32 %v992, %v1358
    %1360 = vmatprep.mubr.f32.mxu0 0.0
    %1361 = vmatmul.mubr.f32.gmra.mrb[0].mxu0 %v1012
    %v1362 = vpop.f32.mrb[0].mxu0
    %v1363 = vadd.f32 %v997, %v1362
    %v1364 = vpop.f32.mrb[0].mxu0
    %v1365 = vadd.f32 %v997, %v1364
    %1366 = vmatprep.mubr.f32.mxu0 0.0
    %1367 = vmatmul.mubr.f32.gmra.mrb[0].mxu0 %v1015
    %v1368 = vpop.f32.mrb[0].mxu0
    %v1369 = vadd.f32 %v1002, %v1368
    %v1370 = vpop.f32.mrb[0].mxu0
    %v1371 = vadd.f32 %v1002, %v1370
    %1372 = vdwg.mxu0
    %v1373 = vmax.f32 %v1084, 0.0
    %v1374 = vmax.f32 %v1086, 0.0
    %v1375 = vmax.f32 %v1173, 0.0
    %v1376 = vmax.f32 %v1175, 0.0
    %v1377 = vmax.f32 %v1262, 0.0
    %v1378 = vmax.f32 %v1264, 0.0
    %v1379 = vmax.f32 %v1351, 0.0
    %v1380 = vmax.f32 %v1353, 0.0
    %v1381 = vmax.f32 %v1090, 0.0
    %v1382 = vmax.f32 %v1092, 0.0
    %v1383 = vmax.f32 %v1179, 0.0
    %v1384 = vmax.f32 %v1181, 0.0
    %v1385 = vmax.f32 %v1268, 0.0
    %v1386 = vmax.f32 %v1270, 0.0
    %v1387 = vmax.f32 %v1357, 0.0
    %v1388 = vmax.f32 %v1359, 0.0
    %v1389 = vmax.f32 %v1096, 0.0
    %v1390 = vmax.f32 %v1098, 0.0
    %v1391 = vmax.f32 %v1185, 0.0
    %v1392 = vmax.f32 %v1187, 0.0
    %v1393 = vmax.f32 %v1274, 0.0
    %v1394 = vmax.f32 %v1276, 0.0
    %v1395 = vmax.f32 %v1363, 0.0
    %v1396 = vmax.f32 %v1365, 0.0
    %v1397 = vmax.f32 %v1102, 0.0
    %v1398 = vmax.f32 %v1104, 0.0
    %v1399 = vmax.f32 %v1191, 0.0
    %v1400 = vmax.f32 %v1193, 0.0
    %v1401 = vmax.f32 %v1280, 0.0
    %v1402 = vmax.f32 %v1282, 0.0
    %v1403 = vmax.f32 %v1369, 0.0
    %v1404 = vmax.f32 %v1371, 0.0
    %v1405 = vld [vmem:[%s5] sm:$0xff]
    %v1406 = vld [vmem:[%s5 + $0x8] sm:$0xff]
    %v1407 = vld [vmem:[%s5 + $0x10] sm:$0xff]
    %v1408 = vld [vmem:[%s5 + $0x18] sm:$0xff]
    %v1409 = vld [vmem:[%s6] sm:$0xff]
    %v1410 = vld [vmem:[%s6 + $0x8] sm:$0xff]
    %v1411 = vld [vmem:[%s6 + $0x10] sm:$0xff]
    %v1412 = vld [vmem:[%s6 + $0x18] sm:$0xff]
    %1414 = vset.pattern.permute.xlu0 0
    %1415 = vperm.xlu0 %1414, %v1409
    %v1416 = vpop.permute.xlu0 %1415
    %1419 = vset.pattern.permute.xlu0 0
    %1420 = vperm.xlu0 %1419, %v1410
    %v1421 = vpop.permute.xlu0 %1420
    %1424 = vset.pattern.permute.xlu0 0
    %1425 = vperm.xlu0 %1424, %v1411
    %v1426 = vpop.permute.xlu0 %1425
    %1429 = vset.pattern.permute.xlu0 0
    %1430 = vperm.xlu0 %1429, %v1412
    %v1431 = vpop.permute.xlu0 %1430
    %v1434 = vsel %vm1004, %v1405, 0
    %v1437 = vsel %vm1004, %v1406, 0
    %v1440 = vsel %vm1004, %v1407, 0
    %v1443 = vsel %vm1004, %v1408, 0
    %1445 = vmatprep.subr.mxu0 %v1374
    %1446 = vmatpush1.msra.mxu0 %v1373
    %1447 = vmatprep.subr.mxu0 %v1382
    %1448 = vmatpush1.msra.mxu0 %v1381
    %1449 = vmatprep.subr.mxu0 %v1390
    %1450 = vmatpush1.msra.mxu0 %v1389
    %1451 = vmatprep.subr.mxu0 %v1398
    %1452 = vmatpush1.msra.mxu0 %v1397
    %1453 = vmatprep.subr.mxu0 0.0
    %1454 = vmatpush1.msra.mxu0 0.0
    %1455 = vmatprep.subr.mxu0 0.0
    %1456 = vmatpush1.msra.mxu0 0.0
    %1457 = vmatprep.subr.mxu0 0.0
    %1458 = vmatpush1.msra.mxu0 0.0
    %1459 = vmatprep.subr.mxu0 0.0
    %1460 = vmatpush1.msra.mxu0 0.0
    %1461 = vmatprep.subr.mxu0 0.0
    %1462 = vmatpush1.msra.mxu0 0.0
    %1463 = vmatprep.subr.mxu0 0.0
    %1464 = vmatpush1.msra.mxu0 0.0
    %1465 = vmatprep.subr.mxu0 0.0
    %1466 = vmatpush1.msra.mxu0 0.0
    %1467 = vmatprep.subr.mxu0 0.0
    %1468 = vmatpush1.msra.mxu0 0.0
    %1469 = vmatprep.subr.mxu0 0.0
    %1470 = vmatpush1.msra.mxu0 0.0
    %1471 = vmatprep.subr.mxu0 0.0
    %1472 = vmatpush1.msra.mxu0 0.0
    %1473 = vmatprep.subr.mxu0 0.0
    %1474 = vmatpush1.msra.mxu0 0.0
    %1475 = vmatprep.subr.mxu0 0.0
    %1476 = vmatpush1.msra.mxu0 0.0
    %1477 = vmatprep.subr.mxu0 0.0
    %1478 = vmatpush1.msra.mxu0 0.0
    %1479 = vmatprep.subr.mxu0 0.0
    %1480 = vmatpush1.msra.mxu0 0.0
    %1481 = vmatprep.subr.mxu0 0.0
    %1482 = vmatpush1.msra.mxu0 0.0
    %1483 = vmatprep.subr.mxu0 0.0
    %1484 = vmatpush1.msra.mxu0 0.0
    %1485 = vmatprep.subr.mxu0 0.0
    %1486 = vmatpush1.msra.mxu0 0.0
    %1487 = vmatprep.subr.mxu0 0.0
    %1488 = vmatpush1.msra.mxu0 0.0
    %1489 = vmatprep.subr.mxu0 0.0
    %1490 = vmatpush1.msra.mxu0 0.0
    %1491 = vmatprep.subr.mxu0 0.0
    %1492 = vmatpush1.msra.mxu0 0.0
    %1493 = vmatprep.subr.mxu0 0.0
    %1494 = vmatpush1.msra.mxu0 0.0
    %1495 = vmatprep.subr.mxu0 0.0
    %1496 = vmatpush1.msra.mxu0 0.0
    %1497 = vmatprep.subr.mxu0 0.0
    %1498 = vmatpush1.msra.mxu0 0.0
    %1499 = vmatprep.subr.mxu0 0.0
    %1500 = vmatpush1.msra.mxu0 0.0
    %1501 = vmatprep.subr.mxu0 0.0
    %1502 = vmatpush1.msra.mxu0 0.0
    %1503 = vmatprep.subr.mxu0 0.0
    %1504 = vmatpush1.msra.mxu0 0.0
    %1505 = vmatprep.subr.mxu0 0.0
    %1506 = vmatpush1.msra.mxu0 0.0
    %1507 = vmatprep.subr.mxu0 0.0
    %1508 = vmatpush1.msra.mxu0 0.0
    %1509 = vmatprep.mubr.f32.mxu0 0.0
    %1510 = vmatmul.mubr.f32.gmra.mrb[0].mxu0 %v1434
    %v1511 = vpop.f32.mrb[0].mxu0
    %v1512 = vadd.f32 %v1416, %v1511
    %v1513 = vpop.f32.mrb[0].mxu0
    %v1514 = vadd.f32 %v1416, %v1513
    %1515 = vmatprep.mubr.f32.mxu0 0.0
    %1516 = vmatmul.mubr.f32.gmra.mrb[0].mxu0 %v1437
    %v1517 = vpop.f32.mrb[0].mxu0
    %v1518 = vadd.f32 %v1421, %v1517
    %v1519 = vpop.f32.mrb[0].mxu0
    %v1520 = vadd.f32 %v1421, %v1519
    %1521 = vmatprep.mubr.f32.mxu0 0.0
    %1522 = vmatmul.mubr.f32.gmra.mrb[0].mxu0 %v1440
    %v1523 = vpop.f32.mrb[0].mxu0
    %v1524 = vadd.f32 %v1426, %v1523
    %v1525 = vpop.f32.mrb[0].mxu0
    %v1526 = vadd.f32 %v1426, %v1525
    %1527 = vmatprep.mubr.f32.mxu0 0.0
    %1528 = vmatmul.mubr.f32.gmra.mrb[0].mxu0 %v1443
    %v1529 = vpop.f32.mrb[0].mxu0
    %v1530 = vadd.f32 %v1431, %v1529
    %v1531 = vpop.f32.mrb[0].mxu0
    %v1532 = vadd.f32 %v1431, %v1531
    %1533 = vdwg.mxu0
    %1534 = vmatprep.subr.mxu0 %v1376
    %1535 = vmatpush1.msra.mxu0 %v1375
    %1536 = vmatprep.subr.mxu0 %v1384
    %1537 = vmatpush1.msra.mxu0 %v1383
    %1538 = vmatprep.subr.mxu0 %v1392
    %1539 = vmatpush1.msra.mxu0 %v1391
    %1540 = vmatprep.subr.mxu0 %v1400
    %1541 = vmatpush1.msra.mxu0 %v1399
    %1542 = vmatprep.subr.mxu0 0.0
    %1543 = vmatpush1.msra.mxu0 0.0
    %1544 = vmatprep.subr.mxu0 0.0
    %1545 = vmatpush1.msra.mxu0 0.0
    %1546 = vmatprep.subr.mxu0 0.0
    %1547 = vmatpush1.msra.mxu0 0.0
    %1548 = vmatprep.subr.mxu0 0.0
    %1549 = vmatpush1.msra.mxu0 0.0
    %1550 = vmatprep.subr.mxu0 0.0
    %1551 = vmatpush1.msra.mxu0 0.0
    %1552 = vmatprep.subr.mxu0 0.0
    %1553 = vmatpush1.msra.mxu0 0.0
    %1554 = vmatprep.subr.mxu0 0.0
    %1555 = vmatpush1.msra.mxu0 0.0
    %1556 = vmatprep.subr.mxu0 0.0
    %1557 = vmatpush1.msra.mxu0 0.0
    %1558 = vmatprep.subr.mxu0 0.0
    %1559 = vmatpush1.msra.mxu0 0.0
    %1560 = vmatprep.subr.mxu0 0.0
    %1561 = vmatpush1.msra.mxu0 0.0
    %1562 = vmatprep.subr.mxu0 0.0
    %1563 = vmatpush1.msra.mxu0 0.0
    %1564 = vmatprep.subr.mxu0 0.0
    %1565 = vmatpush1.msra.mxu0 0.0
    %1566 = vmatprep.subr.mxu0 0.0
    %1567 = vmatpush1.msra.mxu0 0.0
    %1568 = vmatprep.subr.mxu0 0.0
    %1569 = vmatpush1.msra.mxu0 0.0
    %1570 = vmatprep.subr.mxu0 0.0
    %1571 = vmatpush1.msra.mxu0 0.0
    %1572 = vmatprep.subr.mxu0 0.0
    %1573 = vmatpush1.msra.mxu0 0.0
    %1574 = vmatprep.subr.mxu0 0.0
    %1575 = vmatpush1.msra.mxu0 0.0
    %1576 = vmatprep.subr.mxu0 0.0
    %1577 = vmatpush1.msra.mxu0 0.0
    %1578 = vmatprep.subr.mxu0 0.0
    %1579 = vmatpush1.msra.mxu0 0.0
    %1580 = vmatprep.subr.mxu0 0.0
    %1581 = vmatpush1.msra.mxu0 0.0
    %1582 = vmatprep.subr.mxu0 0.0
    %1583 = vmatpush1.msra.mxu0 0.0
    %1584 = vmatprep.subr.mxu0 0.0
    %1585 = vmatpush1.msra.mxu0 0.0
    %1586 = vmatprep.subr.mxu0 0.0
    %1587 = vmatpush1.msra.mxu0 0.0
    %1588 = vmatprep.subr.mxu0 0.0
    %1589 = vmatpush1.msra.mxu0 0.0
    %1590 = vmatprep.subr.mxu0 0.0
    %1591 = vmatpush1.msra.mxu0 0.0
    %1592 = vmatprep.subr.mxu0 0.0
    %1593 = vmatpush1.msra.mxu0 0.0
    %1594 = vmatprep.subr.mxu0 0.0
    %1595 = vmatpush1.msra.mxu0 0.0
    %1596 = vmatprep.subr.mxu0 0.0
    %1597 = vmatpush1.msra.mxu0 0.0
    %1598 = vmatprep.mubr.f32.mxu0 0.0
    %1599 = vmatmul.mubr.f32.gmra.mrb[0].mxu0 %v1434
    %v1600 = vpop.f32.mrb[0].mxu0
    %v1601 = vadd.f32 %v1416, %v1600
    %v1602 = vpop.f32.mrb[0].mxu0
    %v1603 = vadd.f32 %v1416, %v1602
    %1604 = vmatprep.mubr.f32.mxu0 0.0
    %1605 = vmatmul.mubr.f32.gmra.mrb[0].mxu0 %v1437
    %v1606 = vpop.f32.mrb[0].mxu0
    %v1607 = vadd.f32 %v1421, %v1606
    %v1608 = vpop.f32.mrb[0].mxu0
    %v1609 = vadd.f32 %v1421, %v1608
    %1610 = vmatprep.mubr.f32.mxu0 0.0
    %1611 = vmatmul.mubr.f32.gmra.mrb[0].mxu0 %v1440
    %v1612 = vpop.f32.mrb[0].mxu0
    %v1613 = vadd.f32 %v1426, %v1612
    %v1614 = vpop.f32.mrb[0].mxu0
    %v1615 = vadd.f32 %v1426, %v1614
    %1616 = vmatprep.mubr.f32.mxu0 0.0
    %1617 = vmatmul.mubr.f32.gmra.mrb[0].mxu0 %v1443
    %v1618 = vpop.f32.mrb[0].mxu0
    %v1619 = vadd.f32 %v1431, %v1618
    %v1620 = vpop.f32.mrb[0].mxu0
    %v1621 = vadd.f32 %v1431, %v1620
    %1622 = vdwg.mxu0
    %1623 = vmatprep.subr.mxu0 %v1378
    %1624 = vmatpush1.msra.mxu0 %v1377
    %1625 = vmatprep.subr.mxu0 %v1386
    %1626 = vmatpush1.msra.mxu0 %v1385
    %1627 = vmatprep.subr.mxu0 %v1394
    %1628 = vmatpush1.msra.mxu0 %v1393
    %1629 = vmatprep.subr.mxu0 %v1402
    %1630 = vmatpush1.msra.mxu0 %v1401
    %1631 = vmatprep.subr.mxu0 0.0
    %1632 = vmatpush1.msra.mxu0 0.0
    %1633 = vmatprep.subr.mxu0 0.0
    %1634 = vmatpush1.msra.mxu0 0.0
    %1635 = vmatprep.subr.mxu0 0.0
    %1636 = vmatpush1.msra.mxu0 0.0
    %1637 = vmatprep.subr.mxu0 0.0
    %1638 = vmatpush1.msra.mxu0 0.0
    %1639 = vmatprep.subr.mxu0 0.0
    %1640 = vmatpush1.msra.mxu0 0.0
    %1641 = vmatprep.subr.mxu0 0.0
    %1642 = vmatpush1.msra.mxu0 0.0
    %1643 = vmatprep.subr.mxu0 0.0
    %1644 = vmatpush1.msra.mxu0 0.0
    %1645 = vmatprep.subr.mxu0 0.0
    %1646 = vmatpush1.msra.mxu0 0.0
    %1647 = vmatprep.subr.mxu0 0.0
    %1648 = vmatpush1.msra.mxu0 0.0
    %1649 = vmatprep.subr.mxu0 0.0
    %1650 = vmatpush1.msra.mxu0 0.0
    %1651 = vmatprep.subr.mxu0 0.0
    %1652 = vmatpush1.msra.mxu0 0.0
    %1653 = vmatprep.subr.mxu0 0.0
    %1654 = vmatpush1.msra.mxu0 0.0
    %1655 = vmatprep.subr.mxu0 0.0
    %1656 = vmatpush1.msra.mxu0 0.0
    %1657 = vmatprep.subr.mxu0 0.0
    %1658 = vmatpush1.msra.mxu0 0.0
    %1659 = vmatprep.subr.mxu0 0.0
    %1660 = vmatpush1.msra.mxu0 0.0
    %1661 = vmatprep.subr.mxu0 0.0
    %1662 = vmatpush1.msra.mxu0 0.0
    %1663 = vmatprep.subr.mxu0 0.0
    %1664 = vmatpush1.msra.mxu0 0.0
    %1665 = vmatprep.subr.mxu0 0.0
    %1666 = vmatpush1.msra.mxu0 0.0
    %1667 = vmatprep.subr.mxu0 0.0
    %1668 = vmatpush1.msra.mxu0 0.0
    %1669 = vmatprep.subr.mxu0 0.0
    %1670 = vmatpush1.msra.mxu0 0.0
    %1671 = vmatprep.subr.mxu0 0.0
    %1672 = vmatpush1.msra.mxu0 0.0
    %1673 = vmatprep.subr.mxu0 0.0
    %1674 = vmatpush1.msra.mxu0 0.0
    %1675 = vmatprep.subr.mxu0 0.0
    %1676 = vmatpush1.msra.mxu0 0.0
    %1677 = vmatprep.subr.mxu0 0.0
    %1678 = vmatpush1.msra.mxu0 0.0
    %1679 = vmatprep.subr.mxu0 0.0
    %1680 = vmatpush1.msra.mxu0 0.0
    %1681 = vmatprep.subr.mxu0 0.0
    %1682 = vmatpush1.msra.mxu0 0.0
    %1683 = vmatprep.subr.mxu0 0.0
    %1684 = vmatpush1.msra.mxu0 0.0
    %1685 = vmatprep.subr.mxu0 0.0
    %1686 = vmatpush1.msra.mxu0 0.0
    %1687 = vmatprep.mubr.f32.mxu0 0.0
    %1688 = vmatmul.mubr.f32.gmra.mrb[0].mxu0 %v1434
    %v1689 = vpop.f32.mrb[0].mxu0
    %v1690 = vadd.f32 %v1416, %v1689
    %v1691 = vpop.f32.mrb[0].mxu0
    %v1692 = vadd.f32 %v1416, %v1691
    %1693 = vmatprep.mubr.f32.mxu0 0.0
    %1694 = vmatmul.mubr.f32.gmra.mrb[0].mxu0 %v1437
    %v1695 = vpop.f32.mrb[0].mxu0
    %v1696 = vadd.f32 %v1421, %v1695
    %v1697 = vpop.f32.mrb[0].mxu0
    %v1698 = vadd.f32 %v1421, %v1697
    %1699 = vmatprep.mubr.f32.mxu0 0.0
    %1700 = vmatmul.mubr.f32.gmra.mrb[0].mxu0 %v1440
    %v1701 = vpop.f32.mrb[0].mxu0
    %v1702 = vadd.f32 %v1426, %v1701
    %v1703 = vpop.f32.mrb[0].mxu0
    %v1704 = vadd.f32 %v1426, %v1703
    %1705 = vmatprep.mubr.f32.mxu0 0.0
    %1706 = vmatmul.mubr.f32.gmra.mrb[0].mxu0 %v1443
    %v1707 = vpop.f32.mrb[0].mxu0
    %v1708 = vadd.f32 %v1431, %v1707
    %v1709 = vpop.f32.mrb[0].mxu0
    %v1710 = vadd.f32 %v1431, %v1709
    %1711 = vdwg.mxu0
    %1712 = vmatprep.subr.mxu0 %v1380
    %1713 = vmatpush1.msra.mxu0 %v1379
    %1714 = vmatprep.subr.mxu0 %v1388
    %1715 = vmatpush1.msra.mxu0 %v1387
    %1716 = vmatprep.subr.mxu0 %v1396
    %1717 = vmatpush1.msra.mxu0 %v1395
    %1718 = vmatprep.subr.mxu0 %v1404
    %1719 = vmatpush1.msra.mxu0 %v1403
    %1720 = vmatprep.subr.mxu0 0.0
    %1721 = vmatpush1.msra.mxu0 0.0
    %1722 = vmatprep.subr.mxu0 0.0
    %1723 = vmatpush1.msra.mxu0 0.0
    %1724 = vmatprep.subr.mxu0 0.0
    %1725 = vmatpush1.msra.mxu0 0.0
    %1726 = vmatprep.subr.mxu0 0.0
    %1727 = vmatpush1.msra.mxu0 0.0
    %1728 = vmatprep.subr.mxu0 0.0
    %1729 = vmatpush1.msra.mxu0 0.0
    %1730 = vmatprep.subr.mxu0 0.0
    %1731 = vmatpush1.msra.mxu0 0.0
    %1732 = vmatprep.subr.mxu0 0.0
    %1733 = vmatpush1.msra.mxu0 0.0
    %1734 = vmatprep.subr.mxu0 0.0
    %1735 = vmatpush1.msra.mxu0 0.0
    %1736 = vmatprep.subr.mxu0 0.0
    %1737 = vmatpush1.msra.mxu0 0.0
    %1738 = vmatprep.subr.mxu0 0.0
    %1739 = vmatpush1.msra.mxu0 0.0
    %1740 = vmatprep.subr.mxu0 0.0
    %1741 = vmatpush1.msra.mxu0 0.0
    %1742 = vmatprep.subr.mxu0 0.0
    %1743 = vmatpush1.msra.mxu0 0.0
    %1744 = vmatprep.subr.mxu0 0.0
    %1745 = vmatpush1.msra.mxu0 0.0
    %1746 = vmatprep.subr.mxu0 0.0
    %1747 = vmatpush1.msra.mxu0 0.0
    %1748 = vmatprep.subr.mxu0 0.0
    %1749 = vmatpush1.msra.mxu0 0.0
    %1750 = vmatprep.subr.mxu0 0.0
    %1751 = vmatpush1.msra.mxu0 0.0
    %1752 = vmatprep.subr.mxu0 0.0
    %1753 = vmatpush1.msra.mxu0 0.0
    %1754 = vmatprep.subr.mxu0 0.0
    %1755 = vmatpush1.msra.mxu0 0.0
    %1756 = vmatprep.subr.mxu0 0.0
    %1757 = vmatpush1.msra.mxu0 0.0
    %1758 = vmatprep.subr.mxu0 0.0
    %1759 = vmatpush1.msra.mxu0 0.0
    %1760 = vmatprep.subr.mxu0 0.0
    %1761 = vmatpush1.msra.mxu0 0.0
    %1762 = vmatprep.subr.mxu0 0.0
    %1763 = vmatpush1.msra.mxu0 0.0
    %1764 = vmatprep.subr.mxu0 0.0
    %1765 = vmatpush1.msra.mxu0 0.0
    %1766 = vmatprep.subr.mxu0 0.0
    %1767 = vmatpush1.msra.mxu0 0.0
    %1768 = vmatprep.subr.mxu0 0.0
    %1769 = vmatpush1.msra.mxu0 0.0
    %1770 = vmatprep.subr.mxu0 0.0
    %1771 = vmatpush1.msra.mxu0 0.0
    %1772 = vmatprep.subr.mxu0 0.0
    %1773 = vmatpush1.msra.mxu0 0.0
    %1774 = vmatprep.subr.mxu0 0.0
    %1775 = vmatpush1.msra.mxu0 0.0
    %1776 = vmatprep.mubr.f32.mxu0 0.0
    %1777 = vmatmul.mubr.f32.gmra.mrb[0].mxu0 %v1434
    %v1778 = vpop.f32.mrb[0].mxu0
    %v1779 = vadd.f32 %v1416, %v1778
    %v1780 = vpop.f32.mrb[0].mxu0
    %v1781 = vadd.f32 %v1416, %v1780
    %1782 = vmatprep.mubr.f32.mxu0 0.0
    %1783 = vmatmul.mubr.f32.gmra.mrb[0].mxu0 %v1437
    %v1784 = vpop.f32.mrb[0].mxu0
    %v1785 = vadd.f32 %v1421, %v1784
    %v1786 = vpop.f32.mrb[0].mxu0
    %v1787 = vadd.f32 %v1421, %v1786
    %1788 = vmatprep.mubr.f32.mxu0 0.0
    %1789 = vmatmul.mubr.f32.gmra.mrb[0].mxu0 %v1440
    %v1790 = vpop.f32.mrb[0].mxu0
    %v1791 = vadd.f32 %v1426, %v1790
    %v1792 = vpop.f32.mrb[0].mxu0
    %v1793 = vadd.f32 %v1426, %v1792
    %1794 = vmatprep.mubr.f32.mxu0 0.0
    %1795 = vmatmul.mubr.f32.gmra.mrb[0].mxu0 %v1443
    %v1796 = vpop.f32.mrb[0].mxu0
    %v1797 = vadd.f32 %v1431, %v1796
    %v1798 = vpop.f32.mrb[0].mxu0
    %v1799 = vadd.f32 %v1431, %v1798
    %1800 = vdwg.mxu0
    %v1801 = vmax.f32 %v1512, 0.0
    %v1802 = vmax.f32 %v1514, 0.0
    %v1803 = vmax.f32 %v1601, 0.0
    %v1804 = vmax.f32 %v1603, 0.0
    %v1805 = vmax.f32 %v1690, 0.0
    %v1806 = vmax.f32 %v1692, 0.0
    %v1807 = vmax.f32 %v1779, 0.0
    %v1808 = vmax.f32 %v1781, 0.0
    %v1809 = vmax.f32 %v1518, 0.0
    %v1810 = vmax.f32 %v1520, 0.0
    %v1811 = vmax.f32 %v1607, 0.0
    %v1812 = vmax.f32 %v1609, 0.0
    %v1813 = vmax.f32 %v1696, 0.0
    %v1814 = vmax.f32 %v1698, 0.0
    %v1815 = vmax.f32 %v1785, 0.0
    %v1816 = vmax.f32 %v1787, 0.0
    %v1817 = vmax.f32 %v1524, 0.0
    %v1818 = vmax.f32 %v1526, 0.0
    %v1819 = vmax.f32 %v1613, 0.0
    %v1820 = vmax.f32 %v1615, 0.0
    %v1821 = vmax.f32 %v1702, 0.0
    %v1822 = vmax.f32 %v1704, 0.0
    %v1823 = vmax.f32 %v1791, 0.0
    %v1824 = vmax.f32 %v1793, 0.0
    %v1825 = vmax.f32 %v1530, 0.0
    %v1826 = vmax.f32 %v1532, 0.0
    %v1827 = vmax.f32 %v1619, 0.0
    %v1828 = vmax.f32 %v1621, 0.0
    %v1829 = vmax.f32 %v1708, 0.0
    %v1830 = vmax.f32 %v1710, 0.0
    %v1831 = vmax.f32 %v1797, 0.0
    %v1832 = vmax.f32 %v1799, 0.0
    %v1833 = vld [vmem:[%s7] sm:$0x1]
    %v1834 = vld [vmem:[#allocation2] sm:$0x1]
    %1836 = vset.pattern.permute.xlu0 0
    %1837 = vperm.xlu0 %1836, %v1834
    %v1838 = vpop.permute.xlu0 %1837
    %v1840 = vlaneseq
    %v1841 = vshrl.u32 %v1840, 7
    %v1842 = vsub.s32 0, %v1841
    %v1843 = vrot.slane %v1838, %v1842
    %v1845 = vsel %vm1004, %v1833, 0
    %1847 = vmatprep.subr.mxu0 %v1802
    %1848 = vmatpush1.msra.mxu0 %v1801
    %1849 = vmatprep.subr.mxu0 %v1810
    %1850 = vmatpush1.msra.mxu0 %v1809
    %1851 = vmatprep.subr.mxu0 %v1818
    %1852 = vmatpush1.msra.mxu0 %v1817
    %1853 = vmatprep.subr.mxu0 %v1826
    %1854 = vmatpush1.msra.mxu0 %v1825
    %1855 = vmatprep.subr.mxu0 0.0
    %1856 = vmatpush1.msra.mxu0 0.0
    %1857 = vmatprep.subr.mxu0 0.0
    %1858 = vmatpush1.msra.mxu0 0.0
    %1859 = vmatprep.subr.mxu0 0.0
    %1860 = vmatpush1.msra.mxu0 0.0
    %1861 = vmatprep.subr.mxu0 0.0
    %1862 = vmatpush1.msra.mxu0 0.0
    %1863 = vmatprep.subr.mxu0 0.0
    %1864 = vmatpush1.msra.mxu0 0.0
    %1865 = vmatprep.subr.mxu0 0.0
    %1866 = vmatpush1.msra.mxu0 0.0
    %1867 = vmatprep.subr.mxu0 0.0
    %1868 = vmatpush1.msra.mxu0 0.0
    %1869 = vmatprep.subr.mxu0 0.0
    %1870 = vmatpush1.msra.mxu0 0.0
    %1871 = vmatprep.subr.mxu0 0.0
    %1872 = vmatpush1.msra.mxu0 0.0
    %1873 = vmatprep.subr.mxu0 0.0
    %1874 = vmatpush1.msra.mxu0 0.0
    %1875 = vmatprep.subr.mxu0 0.0
    %1876 = vmatpush1.msra.mxu0 0.0
    %1877 = vmatprep.subr.mxu0 0.0
    %1878 = vmatpush1.msra.mxu0 0.0
    %1879 = vmatprep.subr.mxu0 0.0
    %1880 = vmatpush1.msra.mxu0 0.0
    %1881 = vmatprep.subr.mxu0 0.0
    %1882 = vmatpush1.msra.mxu0 0.0
    %1883 = vmatprep.subr.mxu0 0.0
    %1884 = vmatpush1.msra.mxu0 0.0
    %1885 = vmatprep.subr.mxu0 0.0
    %1886 = vmatpush1.msra.mxu0 0.0
    %1887 = vmatprep.subr.mxu0 0.0
    %1888 = vmatpush1.msra.mxu0 0.0
    %1889 = vmatprep.subr.mxu0 0.0
    %1890 = vmatpush1.msra.mxu0 0.0
    %1891 = vmatprep.subr.mxu0 0.0
    %1892 = vmatpush1.msra.mxu0 0.0
    %1893 = vmatprep.subr.mxu0 0.0
    %1894 = vmatpush1.msra.mxu0 0.0
    %1895 = vmatprep.subr.mxu0 0.0
    %1896 = vmatpush1.msra.mxu0 0.0
    %1897 = vmatprep.subr.mxu0 0.0
    %1898 = vmatpush1.msra.mxu0 0.0
    %1899 = vmatprep.subr.mxu0 0.0
    %1900 = vmatpush1.msra.mxu0 0.0
    %1901 = vmatprep.subr.mxu0 0.0
    %1902 = vmatpush1.msra.mxu0 0.0
    %1903 = vmatprep.subr.mxu0 0.0
    %1904 = vmatpush1.msra.mxu0 0.0
    %1905 = vmatprep.subr.mxu0 0.0
    %1906 = vmatpush1.msra.mxu0 0.0
    %1907 = vmatprep.subr.mxu0 0.0
    %1908 = vmatpush1.msra.mxu0 0.0
    %1909 = vmatprep.subr.mxu0 0.0
    %1910 = vmatpush1.msra.mxu0 0.0
    %1911 = vmatprep.mubr.f32.mxu0 0.0
    %1912 = vmatmul.mubr.f32.gmra.mrb[0].mxu0 %v1845
    %v1913 = vpop.f32.mrb[0].mxu0
    %v1914 = vadd.f32 %v1843, %v1913
    %v1915 = vpop.f32.mrb[0].mxu0
    %v1916 = vadd.f32 %v1843, %v1915
    %1917 = vdwg.mxu0
    %1918 = vmatprep.subr.mxu0 %v1804
    %1919 = vmatpush1.msra.mxu0 %v1803
    %1920 = vmatprep.subr.mxu0 %v1812
    %1921 = vmatpush1.msra.mxu0 %v1811
    %1922 = vmatprep.subr.mxu0 %v1820
    %1923 = vmatpush1.msra.mxu0 %v1819
    %1924 = vmatprep.subr.mxu0 %v1828
    %1925 = vmatpush1.msra.mxu0 %v1827
    %1926 = vmatprep.subr.mxu0 0.0
    %1927 = vmatpush1.msra.mxu0 0.0
    %1928 = vmatprep.subr.mxu0 0.0
    %1929 = vmatpush1.msra.mxu0 0.0
    %1930 = vmatprep.subr.mxu0 0.0
    %1931 = vmatpush1.msra.mxu0 0.0
    %1932 = vmatprep.subr.mxu0 0.0
    %1933 = vmatpush1.msra.mxu0 0.0
    %1934 = vmatprep.subr.mxu0 0.0
    %1935 = vmatpush1.msra.mxu0 0.0
    %1936 = vmatprep.subr.mxu0 0.0
    %1937 = vmatpush1.msra.mxu0 0.0
    %1938 = vmatprep.subr.mxu0 0.0
    %1939 = vmatpush1.msra.mxu0 0.0
    %1940 = vmatprep.subr.mxu0 0.0
    %1941 = vmatpush1.msra.mxu0 0.0
    %1942 = vmatprep.subr.mxu0 0.0
    %1943 = vmatpush1.msra.mxu0 0.0
    %1944 = vmatprep.subr.mxu0 0.0
    %1945 = vmatpush1.msra.mxu0 0.0
    %1946 = vmatprep.subr.mxu0 0.0
    %1947 = vmatpush1.msra.mxu0 0.0
    %1948 = vmatprep.subr.mxu0 0.0
    %1949 = vmatpush1.msra.mxu0 0.0
    %1950 = vmatprep.subr.mxu0 0.0
    %1951 = vmatpush1.msra.mxu0 0.0
    %1952 = vmatprep.subr.mxu0 0.0
    %1953 = vmatpush1.msra.mxu0 0.0
    %1954 = vmatprep.subr.mxu0 0.0
    %1955 = vmatpush1.msra.mxu0 0.0
    %1956 = vmatprep.subr.mxu0 0.0
    %1957 = vmatpush1.msra.mxu0 0.0
    %1958 = vmatprep.subr.mxu0 0.0
    %1959 = vmatpush1.msra.mxu0 0.0
    %1960 = vmatprep.subr.mxu0 0.0
    %1961 = vmatpush1.msra.mxu0 0.0
    %1962 = vmatprep.subr.mxu0 0.0
    %1963 = vmatpush1.msra.mxu0 0.0
    %1964 = vmatprep.subr.mxu0 0.0
    %1965 = vmatpush1.msra.mxu0 0.0
    %1966 = vmatprep.subr.mxu0 0.0
    %1967 = vmatpush1.msra.mxu0 0.0
    %1968 = vmatprep.subr.mxu0 0.0
    %1969 = vmatpush1.msra.mxu0 0.0
    %1970 = vmatprep.subr.mxu0 0.0
    %1971 = vmatpush1.msra.mxu0 0.0
    %1972 = vmatprep.subr.mxu0 0.0
    %1973 = vmatpush1.msra.mxu0 0.0
    %1974 = vmatprep.subr.mxu0 0.0
    %1975 = vmatpush1.msra.mxu0 0.0
    %1976 = vmatprep.subr.mxu0 0.0
    %1977 = vmatpush1.msra.mxu0 0.0
    %1978 = vmatprep.subr.mxu0 0.0
    %1979 = vmatpush1.msra.mxu0 0.0
    %1980 = vmatprep.subr.mxu0 0.0
    %1981 = vmatpush1.msra.mxu0 0.0
    %1982 = vmatprep.mubr.f32.mxu0 0.0
    %1983 = vmatmul.mubr.f32.gmra.mrb[0].mxu0 %v1845
    %v1984 = vpop.f32.mrb[0].mxu0
    %v1985 = vadd.f32 %v1843, %v1984
    %v1986 = vpop.f32.mrb[0].mxu0
    %v1987 = vadd.f32 %v1843, %v1986
    %1988 = vdwg.mxu0
    %1989 = vmatprep.subr.mxu0 %v1806
    %1990 = vmatpush1.msra.mxu0 %v1805
    %1991 = vmatprep.subr.mxu0 %v1814
    %1992 = vmatpush1.msra.mxu0 %v1813
    %1993 = vmatprep.subr.mxu0 %v1822
    %1994 = vmatpush1.msra.mxu0 %v1821
    %1995 = vmatprep.subr.mxu0 %v1830
    %1996 = vmatpush1.msra.mxu0 %v1829
    %1997 = vmatprep.subr.mxu0 0.0
    %1998 = vmatpush1.msra.mxu0 0.0
    %1999 = vmatprep.subr.mxu0 0.0
    %2000 = vmatpush1.msra.mxu0 0.0
    %2001 = vmatprep.subr.mxu0 0.0
    %2002 = vmatpush1.msra.mxu0 0.0
    %2003 = vmatprep.subr.mxu0 0.0
    %2004 = vmatpush1.msra.mxu0 0.0
    %2005 = vmatprep.subr.mxu0 0.0
    %2006 = vmatpush1.msra.mxu0 0.0
    %2007 = vmatprep.subr.mxu0 0.0
    %2008 = vmatpush1.msra.mxu0 0.0
    %2009 = vmatprep.subr.mxu0 0.0
    %2010 = vmatpush1.msra.mxu0 0.0
    %2011 = vmatprep.subr.mxu0 0.0
    %2012 = vmatpush1.msra.mxu0 0.0
    %2013 = vmatprep.subr.mxu0 0.0
    %2014 = vmatpush1.msra.mxu0 0.0
    %2015 = vmatprep.subr.mxu0 0.0
    %2016 = vmatpush1.msra.mxu0 0.0
    %2017 = vmatprep.subr.mxu0 0.0
    %2018 = vmatpush1.msra.mxu0 0.0
    %2019 = vmatprep.subr.mxu0 0.0
    %2020 = vmatpush1.msra.mxu0 0.0
    %2021 = vmatprep.subr.mxu0 0.0
    %2022 = vmatpush1.msra.mxu0 0.0
    %2023 = vmatprep.subr.mxu0 0.0
    %2024 = vmatpush1.msra.mxu0 0.0
    %2025 = vmatprep.subr.mxu0 0.0
    %2026 = vmatpush1.msra.mxu0 0.0
    %2027 = vmatprep.subr.mxu0 0.0
    %2028 = vmatpush1.msra.mxu0 0.0
    %2029 = vmatprep.subr.mxu0 0.0
    %2030 = vmatpush1.msra.mxu0 0.0
    %2031 = vmatprep.subr.mxu0 0.0
    %2032 = vmatpush1.msra.mxu0 0.0
    %2033 = vmatprep.subr.mxu0 0.0
    %2034 = vmatpush1.msra.mxu0 0.0
    %2035 = vmatprep.subr.mxu0 0.0
    %2036 = vmatpush1.msra.mxu0 0.0
    %2037 = vmatprep.subr.mxu0 0.0
    %2038 = vmatpush1.msra.mxu0 0.0
    %2039 = vmatprep.subr.mxu0 0.0
    %2040 = vmatpush1.msra.mxu0 0.0
    %2041 = vmatprep.subr.mxu0 0.0
    %2042 = vmatpush1.msra.mxu0 0.0
    %2043 = vmatprep.subr.mxu0 0.0
    %2044 = vmatpush1.msra.mxu0 0.0
    %2045 = vmatprep.subr.mxu0 0.0
    %2046 = vmatpush1.msra.mxu0 0.0
    %2047 = vmatprep.subr.mxu0 0.0
    %2048 = vmatpush1.msra.mxu0 0.0
    %2049 = vmatprep.subr.mxu0 0.0
    %2050 = vmatpush1.msra.mxu0 0.0
    %2051 = vmatprep.subr.mxu0 0.0
    %2052 = vmatpush1.msra.mxu0 0.0
    %2053 = vmatprep.mubr.f32.mxu0 0.0
    %2054 = vmatmul.mubr.f32.gmra.mrb[0].mxu0 %v1845
    %v2055 = vpop.f32.mrb[0].mxu0
    %v2056 = vadd.f32 %v1843, %v2055
    %v2057 = vpop.f32.mrb[0].mxu0
    %v2058 = vadd.f32 %v1843, %v2057
    %2059 = vdwg.mxu0
    %2060 = vmatprep.subr.mxu0 %v1808
    %2061 = vmatpush1.msra.mxu0 %v1807
    %2062 = vmatprep.subr.mxu0 %v1816
    %2063 = vmatpush1.msra.mxu0 %v1815
    %2064 = vmatprep.subr.mxu0 %v1824
    %2065 = vmatpush1.msra.mxu0 %v1823
    %2066 = vmatprep.subr.mxu0 %v1832
    %2067 = vmatpush1.msra.mxu0 %v1831
    %2068 = vmatprep.subr.mxu0 0.0
    %2069 = vmatpush1.msra.mxu0 0.0
    %2070 = vmatprep.subr.mxu0 0.0
    %2071 = vmatpush1.msra.mxu0 0.0
    %2072 = vmatprep.subr.mxu0 0.0
    %2073 = vmatpush1.msra.mxu0 0.0
    %2074 = vmatprep.subr.mxu0 0.0
    %2075 = vmatpush1.msra.mxu0 0.0
    %2076 = vmatprep.subr.mxu0 0.0
    %2077 = vmatpush1.msra.mxu0 0.0
    %2078 = vmatprep.subr.mxu0 0.0
    %2079 = vmatpush1.msra.mxu0 0.0
    %2080 = vmatprep.subr.mxu0 0.0
    %2081 = vmatpush1.msra.mxu0 0.0
    %2082 = vmatprep.subr.mxu0 0.0
    %2083 = vmatpush1.msra.mxu0 0.0
    %2084 = vmatprep.subr.mxu0 0.0
    %2085 = vmatpush1.msra.mxu0 0.0
    %2086 = vmatprep.subr.mxu0 0.0
    %2087 = vmatpush1.msra.mxu0 0.0
    %2088 = vmatprep.subr.mxu0 0.0
    %2089 = vmatpush1.msra.mxu0 0.0
    %2090 = vmatprep.subr.mxu0 0.0
    %2091 = vmatpush1.msra.mxu0 0.0
    %2092 = vmatprep.subr.mxu0 0.0
    %2093 = vmatpush1.msra.mxu0 0.0
    %2094 = vmatprep.subr.mxu0 0.0
    %2095 = vmatpush1.msra.mxu0 0.0
    %2096 = vmatprep.subr.mxu0 0.0
    %2097 = vmatpush1.msra.mxu0 0.0
    %2098 = vmatprep.subr.mxu0 0.0
    %2099 = vmatpush1.msra.mxu0 0.0
    %2100 = vmatprep.subr.mxu0 0.0
    %2101 = vmatpush1.msra.mxu0 0.0
    %2102 = vmatprep.subr.mxu0 0.0
    %2103 = vmatpush1.msra.mxu0 0.0
    %2104 = vmatprep.subr.mxu0 0.0
    %2105 = vmatpush1.msra.mxu0 0.0
    %2106 = vmatprep.subr.mxu0 0.0
    %2107 = vmatpush1.msra.mxu0 0.0
    %2108 = vmatprep.subr.mxu0 0.0
    %2109 = vmatpush1.msra.mxu0 0.0
    %2110 = vmatprep.subr.mxu0 0.0
    %2111 = vmatpush1.msra.mxu0 0.0
    %2112 = vmatprep.subr.mxu0 0.0
    %2113 = vmatpush1.msra.mxu0 0.0
    %2114 = vmatprep.subr.mxu0 0.0
    %2115 = vmatpush1.msra.mxu0 0.0
    %2116 = vmatprep.subr.mxu0 0.0
    %2117 = vmatpush1.msra.mxu0 0.0
    %2118 = vmatprep.subr.mxu0 0.0
    %2119 = vmatpush1.msra.mxu0 0.0
    %2120 = vmatprep.subr.mxu0 0.0
    %2121 = vmatpush1.msra.mxu0 0.0
    %2122 = vmatprep.subr.mxu0 0.0
    %2123 = vmatpush1.msra.mxu0 0.0
    %2124 = vmatprep.mubr.f32.mxu0 0.0
    %2125 = vmatmul.mubr.f32.gmra.mrb[0].mxu0 %v1845
    %v2126 = vpop.f32.mrb[0].mxu0
    %v2127 = vadd.f32 %v1843, %v2126
    %v2128 = vpop.f32.mrb[0].mxu0
    %v2129 = vadd.f32 %v1843, %v2128
    %2130 = vdwg.mxu0
    %v2139 = vcombine.low %v1914, %v1916
    %v2140 = vcombine.low %v1985, %v1987
    %v2141 = vcombine.low %v2056, %v2058
    %v2142 = vcombine.low %v2127, %v2129
    %v2144 = vunpack.c.l.s4 1966171168
    %v2145 = vunpack.c.0.s8 %v2144
    %v2146 = vlaneseq
    %v2147 = vshrl.u32 %v2146, 7
    %v2148 = vsub.s32 %v2145, %v2147
    %v2149 = vrot.slane %v2139, %v2148
    %v2151 = vunpack.c.l.s4 1966171168
    %v2152 = vunpack.c.0.s8 %v2151
    %v2153 = vlaneseq
    %v2154 = vshrl.u32 %v2153, 7
    %v2155 = vsub.s32 %v2152, %v2154
    %v2156 = vrot.slane %v2140, %v2155
    %v2158 = vunpack.c.l.s4 1966171168
    %v2159 = vunpack.c.0.s8 %v2158
    %v2160 = vlaneseq
    %v2161 = vshrl.u32 %v2160, 7
    %v2162 = vsub.s32 %v2159, %v2161
    %v2163 = vrot.slane %v2141, %v2162
    %v2165 = vunpack.c.l.s4 1966171168
    %v2166 = vunpack.c.0.s8 %v2165
    %v2167 = vlaneseq
    %v2168 = vshrl.u32 %v2167, 7
    %v2169 = vsub.s32 %v2166, %v2168
    %v2170 = vrot.slane %v2142, %v2169
    %v2171 = vcombine.low %v2149, %v2156
    %v2172 = vcombine.low %v2163, %v2170
    %v2174 = vunpack.c.l.s4 1966171168
    %v2175 = vunpack.c.0.s8 %v2174
    %v2176 = vlaneseq
    %v2177 = vshrl.u32 %v2176, 7
    %v2178 = vsub.s32 %v2175, %v2177
    %v2179 = vrot.slane %v2171, %v2178
    %v2181 = vunpack.c.l.s4 1966171168
    %v2182 = vunpack.c.0.s8 %v2181
    %v2183 = vlaneseq
    %v2184 = vshrl.u32 %v2183, 7
    %v2185 = vsub.s32 %v2182, %v2184
    %v2186 = vrot.slane %v2172, %v2185
    %v2187 = vcombine.low %v2179, %v2186
    %2189 = vst [vmem:[#allocation3] sm:$0xff] %v2187
    // Predicated region
    $region38: #{deep_corrector_mlp.1} parent=1 // pred_check
      _
    $region39: #{deep_corrector_mlp.1} parent=1 // pred_check_branch
      %2191 = sbr.rel (0) target = $region41
    $region40: #{deep_corrector_mlp.1} parent=1 // pred_region
      %s2193 = ssub.s32 128, 128
      %2194 = vsyncadd [#allocation4], %s2193
      %s2196 = sshll.u32 [#allocation3], 4
      %s2197 = int_to_ptr.vmem [resolvable:$true] %s2196
      %2199 = dma.vmem_to_hbm [thread:$0]  %s2197, 128, %s9, [#allocation4]
    $region41: #{deep_corrector_mlp.1} parent=1 // pred_fallthru
      _
    // Predicated region
    $region42: #{deep_corrector_mlp.1} parent=1 // pred_check
      _
    $region43: #{deep_corrector_mlp.1} parent=1 // pred_check_branch
      %2201 = sbr.rel (0) target = $region45
    $region44: #{deep_corrector_mlp.1} parent=1 // pred_region
      %2202 = dma.done [#allocation4], 128
    $region45: #{deep_corrector_mlp.1} parent=1 // pred_fallthru
      _
    %2203 = vsyncpa [#allocation4], 1

</llo_original>
